<compile_context>
chip_gen: v7x
topology: tpu7x:2x2x1
jax: 0.10.0
libtpu: 0.0.40
codegen_flags: <defaults>
</compile_context>

<pallas_src>
import functools

import jax
import jax.numpy as jnp
from jax import lax
from jax.experimental import pallas as pl
from jax.experimental.pallas import tpu as pltpu

_LANE = 128           # feature dims padded to lane width
_SUBLANE = 8          # batch tiles padded to sublane width
_TARGET_TILE_B = 256  # feeds the 2x256^2 MXU on v6e/v7x; fine (2x128) on v5e


def _round_up(x, m):
    return (x + m - 1) // m * m


def _mlp_kernel(z_ref, w0_ref, b0_ref, wh_ref, bh_ref, wl_ref, bl_ref,
                out_ref, *, num_hidden):
    """Fused MLP: Linear+ReLU, (depth-2) x (Linear+ReLU), Linear (no ReLU)."""
    cdt = w0_ref.dtype          # matmul-operand dtype (bf16)
    x = z_ref[...]              # (tile_b, in_p), already bf16

    # First layer: f32 accumulate, f32 bias/ReLU epilogue.
    h = jnp.dot(x, w0_ref[...], preferred_element_type=jnp.float32) + b0_ref[...]
    h = jnp.maximum(h, 0.0)

    def layer(i, h):
        w = wh_ref[i]           # (hid_p, hid_p)  bf16
        b = bh_ref[i]           # (1, hid_p)      f32
        y = jnp.dot(h.astype(cdt), w, preferred_element_type=jnp.float32) + b
        return jnp.maximum(y, 0.0)

    if 0 < num_hidden <= 8:
        # Small depth: keep the loop unrolled so the LLO scheduler sees it all.
        for i in range(num_hidden):
            h = layer(i, h)
    elif num_hidden > 8:
        # Large depth: fori_loop bounds vreg live ranges per layer (no spills).
        h = lax.fori_loop(0, num_hidden, layer, h)

    y = jnp.dot(h.astype(cdt), wl_ref[...], preferred_element_type=jnp.float32)
    out_ref[...] = (y + bl_ref[...]).astype(out_ref.dtype)


def _pick_tile_b(batch, in_p, hid_p, out_p, resident_weight_bytes):
    """Largest multiple-of-8 row tile (<= 256) that fits a ~48 MiB budget,
    split so the 'parallel' grid axis has >= 2 steps whenever batch allows."""
    # per-row VMEM: bf16 z tile (x2 buffers) + f32 out tile (x2 buffers)
    # + transient f32/bf16 activations.
    per_row = 2 * (in_p * 2) + 2 * (out_p * 4) + hid_p * (4 + 2)
    budget = 48 * 2**20
    avail = max(budget - resident_weight_bytes, 1 << 20)
    tile = min(_TARGET_TILE_B, max(avail // per_row, _SUBLANE))
    tile = max((tile // _SUBLANE) * _SUBLANE, _SUBLANE)
    b_pad = _round_up(batch, _SUBLANE)
    tile = min(tile, b_pad)
    if b_pad <= tile and b_pad >= 2 * _SUBLANE:
        # Give v7x's two TensorCores at least 2 grid steps to shard.
        tile = max((b_pad // 2 // _SUBLANE) * _SUBLANE, _SUBLANE)
    b_pad = _round_up(batch, tile)
    return tile, b_pad


def noise_mapper_pallas(z, params, *, depth, compute_dtype=jnp.bfloat16,
                        single_buffer_weights=True):
    """params (unpadded, f32): w0 (in,hid), b0 (1,hid),
    wh (max(depth-2,1),hid,hid), bh (max(depth-2,1),1,hid),
    wl (hid,out), bl (1,out)."""
    batch, in_dim = z.shape
    hidden = params["w0"].shape[1]
    out_dim = params["wl"].shape[1]
    num_hidden = depth - 2

    # ---- lane-dense zero-padding of feature dims (numerically exact) ----
    in_p = _round_up(in_dim, _LANE)
    hid_p = _round_up(hidden, _LANE)
    out_p = _round_up(out_dim, _LANE)

    def pad_to(a, shape):
        return jnp.pad(a, [(0, t - s) for s, t in zip(a.shape, shape)])

    w0 = pad_to(params["w0"], (in_p, hid_p)).astype(compute_dtype)
    b0 = pad_to(params["b0"], (1, hid_p)).astype(jnp.float32)
    wl = pad_to(params["wl"], (hid_p, out_p)).astype(compute_dtype)
    bl = pad_to(params["bl"], (1, out_p)).astype(jnp.float32)

    if num_hidden > 0:
        n_alloc = num_hidden
        wh = pad_to(params["wh"][:num_hidden],
                    (n_alloc, hid_p, hid_p)).astype(compute_dtype)
        bh = pad_to(params["bh"][:num_hidden],
                    (n_alloc, 1, hid_p)).astype(jnp.float32)
        wh_shape, bh_shape = (n_alloc, hid_p, hid_p), (n_alloc, 1, hid_p)
    else:
        # depth == 2: never read in-kernel; keep a tiny (8,128)-tiled dummy so
        # no dead weight bytes are DMA'd or kept resident.
        wh = jnp.zeros((1, _SUBLANE, _LANE), compute_dtype)
        bh = jnp.zeros((1, 1, _LANE), jnp.float32)
        wh_shape, bh_shape = (1, _SUBLANE, _LANE), (1, 1, _LANE)

    weight_bytes = int((w0.size + wh.size + wl.size) * 2
                       + (b0.size + bh.size + bl.size) * 4)

    # ---- batch tiling (handles ragged batch by zero-padding rows) ----
    tile_b, b_pad = _pick_tile_b(batch, in_p, hid_p, out_p, 2 * weight_bytes)
    z_p = pad_to(z, (b_pad, in_p)).astype(compute_dtype)
    grid = (b_pad // tile_b,)

    act_bytes = tile_b * (2 * in_p * 2 + 2 * out_p * 4 + hid_p * 6)
    vmem_limit = int(min(max(2 * weight_bytes + act_bytes + (8 << 20), 32 << 20),
                         128 << 20))

    flops = 2 * b_pad * (in_p * hid_p + num_hidden * hid_p * hid_p + hid_p * out_p)
    bytes_accessed = z_p.size * 2 + b_pad * out_p * 4 + weight_bytes
    cost = pl.CostEstimate(flops=int(flops), transcendentals=0,
                           bytes_accessed=int(bytes_accessed))

    kernel = functools.partial(_mlp_kernel, num_hidden=num_hidden)

    def const_spec(shape, single):
        n = len(shape)
        idx = lambda i, _n=n: (0,) * _n
        if single:
            # Grid-invariant weights: single-buffered to halve VMEM footprint.
            return pl.BlockSpec(shape, idx, pipeline_mode=pl.Buffered(1))
        return pl.BlockSpec(shape, idx)

    def build(single):
        return pl.pallas_call(
            kernel,
            out_shape=jax.ShapeDtypeStruct((b_pad, out_p), jnp.float32),
            grid_spec=pltpu.PrefetchScalarGridSpec(
                num_scalar_prefetch=0,
                grid=grid,
                in_specs=[
                    pl.BlockSpec((tile_b, in_p), lambda i: (i, 0)),  # z tile
                    const_spec((in_p, hid_p), single),               # w0
                    const_spec((1, hid_p), single),                  # b0
                    const_spec(wh_shape, single),                    # wh stack
                    const_spec(bh_shape, single),                    # bh stack
                    const_spec((hid_p, out_p), single),              # wl
                    const_spec((1, out_p), single),                  # bl
                ],
                out_specs=pl.BlockSpec((tile_b, out_p), lambda i: (i, 0)),
            ),
            compiler_params=pltpu.CompilerParams(
                dimension_semantics=("parallel",),
                vmem_limit_bytes=vmem_limit),
            cost_estimate=cost,
        )

    args = (z_p, w0, b0, wh, bh, wl, bl)
    if single_buffer_weights:
        try:
            out_padded = build(True)(*args)
        except Exception:
            # pipeline_mode=pl.Buffered not supported by this JAX build;
            # fall back to default (double-buffered) weight specs.
            out_padded = build(False)(*args)
    else:
        out_padded = build(False)(*args)

    return out_padded[:batch, :out_dim].astype(z.dtype)


def init_params(key, in_dim, hidden_dim, out_dim, depth, dtype=jnp.float32):
    """Deterministic init mimicking nn.Linear's U(-1/sqrt(fan_in), 1/sqrt(fan_in)).
    Weights stored as (in_features, out_features) (already transposed)."""
    assert depth >= 2, "NoiseMapper needs at least the first and last Linear"
    ks = jax.random.split(key, 2 * depth)

    def lin(kw, kb, fan_in, fan_out):
        bound = 1.0 / (fan_in ** 0.5)
        w = jax.random.uniform(kw, (fan_in, fan_out), dtype, -bound, bound)
        b = jax.random.uniform(kb, (1, fan_out), dtype, -bound, bound)
        return w, b

    w0, b0 = lin(ks[0], ks[1], in_dim, hidden_dim)
    n_hidden = depth - 2
    if n_hidden > 0:
        whs, bhs = [], []
        for j in range(n_hidden):
            w, b = lin(ks[2 + 2 * j], ks[3 + 2 * j], hidden_dim, hidden_dim)
            whs.append(w[None])
            bhs.append(b[None])
        wh = jnp.concatenate(whs, axis=0)
        bh = jnp.concatenate(bhs, axis=0)
    else:  # depth == 2: no hidden layers, keep a dummy (ignored) slot
        wh = jnp.zeros((1, hidden_dim, hidden_dim), dtype)
        bh = jnp.zeros((1, 1, hidden_dim), dtype)
    wl, bl = lin(ks[2 * depth - 2], ks[2 * depth - 1], hidden_dim, out_dim)
    return {"w0": w0, "b0": b0, "wh": wh, "bh": bh, "wl": wl, "bl": bl}


def noise_mapper_ref(z, params, *, depth):
    """Pure-JAX f32 reference of the PyTorch forward pass."""
    x = jnp.maximum(z @ params["w0"] + params["b0"], 0.0)
    for i in range(depth - 2):
        x = jnp.maximum(x @ params["wh"][i] + params["bh"][i], 0.0)
    return x @ params["wl"] + params["bl"]


if __name__ == "__main__":
    # Small shapes consistent with the module (z is (batch, in_dim)).
    batch, in_dim, hidden_dim, out_dim, depth = 32, 64, 64, 64, 8

    key = jax.random.PRNGKey(0)
    kz, kp = jax.random.split(key)
    z = jax.random.normal(kz, (batch, in_dim), jnp.float32)
    params = init_params(kp, in_dim, hidden_dim, out_dim, depth)

    w = noise_mapper_pallas(z, params, depth=depth)
    w = jax.block_until_ready(w)

    w_ref = noise_mapper_ref(z, params, depth=depth)
    assert w.shape == (batch, out_dim)
    # bf16 matmul operands with f32 accumulation -> small error vs f32 reference.
    assert jnp.allclose(w, w_ref, rtol=5e-2, atol=5e-3), "mismatch vs reference"

    # Also exercise the depth == 2 path (no hidden layers, dummy wh/bh slot).
    params2 = init_params(jax.random.PRNGKey(1), in_dim, hidden_dim, out_dim, 2)
    w2 = jax.block_until_ready(noise_mapper_pallas(z, params2, depth=2))
    w2_ref = noise_mapper_ref(z, params2, depth=2)
    assert jnp.allclose(w2, w2_ref, rtol=5e-2, atol=5e-3), "depth=2 mismatch"

    print("KERNEL_OK")
</pallas_src>

<mosaic_0001>
module attributes {stable_mosaic.version = 11 : i64} {
  func.func @_mlp_kernel(%arg0: i32, %arg1: memref<16x128xbf16, #tpu.memory_space<vmem>>, %arg2: memref<128x128xbf16, #tpu.memory_space<vmem>>, %arg3: memref<1x128xf32, #tpu.memory_space<vmem>>, %arg4: memref<6x128x128xbf16, #tpu.memory_space<vmem>>, %arg5: memref<6x1x128xf32, #tpu.memory_space<vmem>>, %arg6: memref<128x128xbf16, #tpu.memory_space<vmem>>, %arg7: memref<1x128xf32, #tpu.memory_space<vmem>>, %arg8: memref<16x128xf32, #tpu.memory_space<vmem>>) attributes {dimension_semantics = [#tpu.dimension_semantics<parallel>], iteration_bounds = array<i64: 2>, scalar_prefetch = 0 : i64, scratch_operands = 0 : i64, tpu.core_type = #tpu.core_type<tc>, window_params = [{transform_indices = @transform_0, window_bounds = array<i64: 16, 128>}, {pipeline_mode = #tpu.pipeline_mode<synchronous>, transform_indices = @transform_1, window_bounds = array<i64: 128, 128>}, {pipeline_mode = #tpu.pipeline_mode<synchronous>, transform_indices = @transform_2, window_bounds = array<i64: 1, 128>}, {pipeline_mode = #tpu.pipeline_mode<synchronous>, transform_indices = @transform_3, window_bounds = array<i64: 6, 128, 128>}, {pipeline_mode = #tpu.pipeline_mode<synchronous>, transform_indices = @transform_4, window_bounds = array<i64: 6, 1, 128>}, {pipeline_mode = #tpu.pipeline_mode<synchronous>, transform_indices = @transform_5, window_bounds = array<i64: 128, 128>}, {pipeline_mode = #tpu.pipeline_mode<synchronous>, transform_indices = @transform_6, window_bounds = array<i64: 1, 128>}, {transform_indices = @transform_7, window_bounds = array<i64: 16, 128>}]} {
    %c0 = arith.constant 0 : index
    %c0_0 = arith.constant 0 : index
    %0 = vector.load %arg1[%c0, %c0_0] : memref<16x128xbf16, #tpu.memory_space<vmem>>, vector<16x128xbf16>
    %c0_1 = arith.constant 0 : index
    %c0_2 = arith.constant 0 : index
    %1 = vector.load %arg2[%c0_1, %c0_2] : memref<128x128xbf16, #tpu.memory_space<vmem>>, vector<128x128xbf16>
    %cst = arith.constant dense<0.000000e+00> : vector<16x128xf32>
    %2 = tpu.matmul %0, %1, %cst {dimension_numbers = #tpu.dot_dimension_numbers<[1], [0], [0], [1], [0, 0, 1, 1], [], []>} : vector<16x128xbf16>, vector<128x128xbf16>, vector<16x128xf32> -> vector<16x128xf32>
    %c0_3 = arith.constant 0 : index
    %c0_4 = arith.constant 0 : index
    %3 = vector.load %arg3[%c0_3, %c0_4] : memref<1x128xf32, #tpu.memory_space<vmem>>, vector<1x128xf32>
    %4 = vector.broadcast %3 : vector<1x128xf32> to vector<16x128xf32>
    %5 = arith.addf %2, %4 : vector<16x128xf32>
    %cst_5 = arith.constant 0.000000e+00 : f32
    %6 = vector.broadcast %cst_5 : f32 to vector<16x128xf32>
    %7 = arith.maximumf %5, %6 : vector<16x128xf32>
    %c0_6 = arith.constant 0 : index
    %c0_7 = arith.constant 0 : index
    %c0_8 = arith.constant 0 : index
    %8 = vector.load %arg4[%c0_6, %c0_7, %c0_8] : memref<6x128x128xbf16, #tpu.memory_space<vmem>>, vector<1x128x128xbf16>
    %9 = vector.shape_cast %8 : vector<1x128x128xbf16> to vector<128x128xbf16>
    %c0_9 = arith.constant 0 : index
    %c0_10 = arith.constant 0 : index
    %c0_11 = arith.constant 0 : index
    %10 = vector.load %arg5[%c0_9, %c0_10, %c0_11] : memref<6x1x128xf32, #tpu.memory_space<vmem>>, vector<1x1x128xf32>
    %11 = vector.shape_cast %10 : vector<1x1x128xf32> to vector<1x128xf32>
    %12 = arith.truncf %7 : vector<16x128xf32> to vector<16x128xbf16>
    %cst_12 = arith.constant dense<0.000000e+00> : vector<16x128xf32>
    %13 = tpu.matmul %12, %9, %cst_12 {dimension_numbers = #tpu.dot_dimension_numbers<[1], [0], [0], [1], [0, 0, 1, 1], [], []>} : vector<16x128xbf16>, vector<128x128xbf16>, vector<16x128xf32> -> vector<16x128xf32>
    %14 = vector.broadcast %11 : vector<1x128xf32> to vector<16x128xf32>
    %15 = arith.addf %13, %14 : vector<16x128xf32>
    %cst_13 = arith.constant 0.000000e+00 : f32
    %16 = vector.broadcast %cst_13 : f32 to vector<16x128xf32>
    %17 = arith.maximumf %15, %16 : vector<16x128xf32>
    %c1 = arith.constant 1 : index
    %c0_14 = arith.constant 0 : index
    %c0_15 = arith.constant 0 : index
    %18 = vector.load %arg4[%c1, %c0_14, %c0_15] : memref<6x128x128xbf16, #tpu.memory_space<vmem>>, vector<1x128x128xbf16>
    %19 = vector.shape_cast %18 : vector<1x128x128xbf16> to vector<128x128xbf16>
    %c1_16 = arith.constant 1 : index
    %c0_17 = arith.constant 0 : index
    %c0_18 = arith.constant 0 : index
    %20 = vector.load %arg5[%c1_16, %c0_17, %c0_18] : memref<6x1x128xf32, #tpu.memory_space<vmem>>, vector<1x1x128xf32>
    %21 = vector.shape_cast %20 : vector<1x1x128xf32> to vector<1x128xf32>
    %22 = arith.truncf %17 : vector<16x128xf32> to vector<16x128xbf16>
    %cst_19 = arith.constant dense<0.000000e+00> : vector<16x128xf32>
    %23 = tpu.matmul %22, %19, %cst_19 {dimension_numbers = #tpu.dot_dimension_numbers<[1], [0], [0], [1], [0, 0, 1, 1], [], []>} : vector<16x128xbf16>, vector<128x128xbf16>, vector<16x128xf32> -> vector<16x128xf32>
    %24 = vector.broadcast %21 : vector<1x128xf32> to vector<16x128xf32>
    %25 = arith.addf %23, %24 : vector<16x128xf32>
    %cst_20 = arith.constant 0.000000e+00 : f32
    %26 = vector.broadcast %cst_20 : f32 to vector<16x128xf32>
    %27 = arith.maximumf %25, %26 : vector<16x128xf32>
    %c2 = arith.constant 2 : index
    %c0_21 = arith.constant 0 : index
    %c0_22 = arith.constant 0 : index
    %28 = vector.load %arg4[%c2, %c0_21, %c0_22] : memref<6x128x128xbf16, #tpu.memory_space<vmem>>, vector<1x128x128xbf16>
    %29 = vector.shape_cast %28 : vector<1x128x128xbf16> to vector<128x128xbf16>
    %c2_23 = arith.constant 2 : index
    %c0_24 = arith.constant 0 : index
    %c0_25 = arith.constant 0 : index
    %30 = vector.load %arg5[%c2_23, %c0_24, %c0_25] : memref<6x1x128xf32, #tpu.memory_space<vmem>>, vector<1x1x128xf32>
    %31 = vector.shape_cast %30 : vector<1x1x128xf32> to vector<1x128xf32>
    %32 = arith.truncf %27 : vector<16x128xf32> to vector<16x128xbf16>
    %cst_26 = arith.constant dense<0.000000e+00> : vector<16x128xf32>
    %33 = tpu.matmul %32, %29, %cst_26 {dimension_numbers = #tpu.dot_dimension_numbers<[1], [0], [0], [1], [0, 0, 1, 1], [], []>} : vector<16x128xbf16>, vector<128x128xbf16>, vector<16x128xf32> -> vector<16x128xf32>
    %34 = vector.broadcast %31 : vector<1x128xf32> to vector<16x128xf32>
    %35 = arith.addf %33, %34 : vector<16x128xf32>
    %cst_27 = arith.constant 0.000000e+00 : f32
    %36 = vector.broadcast %cst_27 : f32 to vector<16x128xf32>
    %37 = arith.maximumf %35, %36 : vector<16x128xf32>
    %c3 = arith.constant 3 : index
    %c0_28 = arith.constant 0 : index
    %c0_29 = arith.constant 0 : index
    %38 = vector.load %arg4[%c3, %c0_28, %c0_29] : memref<6x128x128xbf16, #tpu.memory_space<vmem>>, vector<1x128x128xbf16>
    %39 = vector.shape_cast %38 : vector<1x128x128xbf16> to vector<128x128xbf16>
    %c3_30 = arith.constant 3 : index
    %c0_31 = arith.constant 0 : index
    %c0_32 = arith.constant 0 : index
    %40 = vector.load %arg5[%c3_30, %c0_31, %c0_32] : memref<6x1x128xf32, #tpu.memory_space<vmem>>, vector<1x1x128xf32>
    %41 = vector.shape_cast %40 : vector<1x1x128xf32> to vector<1x128xf32>
    %42 = arith.truncf %37 : vector<16x128xf32> to vector<16x128xbf16>
    %cst_33 = arith.constant dense<0.000000e+00> : vector<16x128xf32>
    %43 = tpu.matmul %42, %39, %cst_33 {dimension_numbers = #tpu.dot_dimension_numbers<[1], [0], [0], [1], [0, 0, 1, 1], [], []>} : vector<16x128xbf16>, vector<128x128xbf16>, vector<16x128xf32> -> vector<16x128xf32>
    %44 = vector.broadcast %41 : vector<1x128xf32> to vector<16x128xf32>
    %45 = arith.addf %43, %44 : vector<16x128xf32>
    %cst_34 = arith.constant 0.000000e+00 : f32
    %46 = vector.broadcast %cst_34 : f32 to vector<16x128xf32>
    %47 = arith.maximumf %45, %46 : vector<16x128xf32>
    %c4 = arith.constant 4 : index
    %c0_35 = arith.constant 0 : index
    %c0_36 = arith.constant 0 : index
    %48 = vector.load %arg4[%c4, %c0_35, %c0_36] : memref<6x128x128xbf16, #tpu.memory_space<vmem>>, vector<1x128x128xbf16>
    %49 = vector.shape_cast %48 : vector<1x128x128xbf16> to vector<128x128xbf16>
    %c4_37 = arith.constant 4 : index
    %c0_38 = arith.constant 0 : index
    %c0_39 = arith.constant 0 : index
    %50 = vector.load %arg5[%c4_37, %c0_38, %c0_39] : memref<6x1x128xf32, #tpu.memory_space<vmem>>, vector<1x1x128xf32>
    %51 = vector.shape_cast %50 : vector<1x1x128xf32> to vector<1x128xf32>
    %52 = arith.truncf %47 : vector<16x128xf32> to vector<16x128xbf16>
    %cst_40 = arith.constant dense<0.000000e+00> : vector<16x128xf32>
    %53 = tpu.matmul %52, %49, %cst_40 {dimension_numbers = #tpu.dot_dimension_numbers<[1], [0], [0], [1], [0, 0, 1, 1], [], []>} : vector<16x128xbf16>, vector<128x128xbf16>, vector<16x128xf32> -> vector<16x128xf32>
    %54 = vector.broadcast %51 : vector<1x128xf32> to vector<16x128xf32>
    %55 = arith.addf %53, %54 : vector<16x128xf32>
    %cst_41 = arith.constant 0.000000e+00 : f32
    %56 = vector.broadcast %cst_41 : f32 to vector<16x128xf32>
    %57 = arith.maximumf %55, %56 : vector<16x128xf32>
    %c5 = arith.constant 5 : index
    %c0_42 = arith.constant 0 : index
    %c0_43 = arith.constant 0 : index
    %58 = vector.load %arg4[%c5, %c0_42, %c0_43] : memref<6x128x128xbf16, #tpu.memory_space<vmem>>, vector<1x128x128xbf16>
    %59 = vector.shape_cast %58 : vector<1x128x128xbf16> to vector<128x128xbf16>
    %c5_44 = arith.constant 5 : index
    %c0_45 = arith.constant 0 : index
    %c0_46 = arith.constant 0 : index
    %60 = vector.load %arg5[%c5_44, %c0_45, %c0_46] : memref<6x1x128xf32, #tpu.memory_space<vmem>>, vector<1x1x128xf32>
    %61 = vector.shape_cast %60 : vector<1x1x128xf32> to vector<1x128xf32>
    %62 = arith.truncf %57 : vector<16x128xf32> to vector<16x128xbf16>
    %cst_47 = arith.constant dense<0.000000e+00> : vector<16x128xf32>
    %63 = tpu.matmul %62, %59, %cst_47 {dimension_numbers = #tpu.dot_dimension_numbers<[1], [0], [0], [1], [0, 0, 1, 1], [], []>} : vector<16x128xbf16>, vector<128x128xbf16>, vector<16x128xf32> -> vector<16x128xf32>
    %64 = vector.broadcast %61 : vector<1x128xf32> to vector<16x128xf32>
    %65 = arith.addf %63, %64 : vector<16x128xf32>
    %cst_48 = arith.constant 0.000000e+00 : f32
    %66 = vector.broadcast %cst_48 : f32 to vector<16x128xf32>
    %67 = arith.maximumf %65, %66 : vector<16x128xf32>
    %68 = arith.truncf %67 : vector<16x128xf32> to vector<16x128xbf16>
    %c0_49 = arith.constant 0 : index
    %c0_50 = arith.constant 0 : index
    %69 = vector.load %arg6[%c0_49, %c0_50] : memref<128x128xbf16, #tpu.memory_space<vmem>>, vector<128x128xbf16>
    %cst_51 = arith.constant dense<0.000000e+00> : vector<16x128xf32>
    %70 = tpu.matmul %68, %69, %cst_51 {dimension_numbers = #tpu.dot_dimension_numbers<[1], [0], [0], [1], [0, 0, 1, 1], [], []>} : vector<16x128xbf16>, vector<128x128xbf16>, vector<16x128xf32> -> vector<16x128xf32>
    %c0_52 = arith.constant 0 : index
    %c0_53 = arith.constant 0 : index
    %71 = vector.load %arg7[%c0_52, %c0_53] : memref<1x128xf32, #tpu.memory_space<vmem>>, vector<1x128xf32>
    %72 = vector.broadcast %71 : vector<1x128xf32> to vector<16x128xf32>
    %73 = arith.addf %70, %72 : vector<16x128xf32>
    %c0_54 = arith.constant 0 : index
    %c0_55 = arith.constant 0 : index
    %74 = vector.load %arg8[%c0_54, %c0_55] : memref<16x128xf32, #tpu.memory_space<vmem>>, vector<16x128xf32>
    tpu.vector_store %arg8[%c0_54, %c0_55], %73 {strides = array<i32>} : memref<16x128xf32, #tpu.memory_space<vmem>>, vector<16x128xf32>,
    return
  }
  func.func @transform_0(%arg0: i32) -> (i32, i32) {
    %c0_i32 = arith.constant 0 : i32
    %c0_i32_0 = arith.constant 0 : i32
    return %arg0, %c0_i32 : i32, i32
  }
  func.func @transform_1(%arg0: i32) -> (i32, i32) {
    %c0_i32 = arith.constant 0 : i32
    %c0_i32_0 = arith.constant 0 : i32
    %c0_i32_1 = arith.constant 0 : i32
    return %c0_i32, %c0_i32_0 : i32, i32
  }
  func.func @transform_2(%arg0: i32) -> (i32, i32) {
    %c0_i32 = arith.constant 0 : i32
    %c0_i32_0 = arith.constant 0 : i32
    %c0_i32_1 = arith.constant 0 : i32
    return %c0_i32, %c0_i32_0 : i32, i32
  }
  func.func @transform_3(%arg0: i32) -> (i32, i32, i32) {
    %c0_i32 = arith.constant 0 : i32
    %c0_i32_0 = arith.constant 0 : i32
    %c0_i32_1 = arith.constant 0 : i32
    %c0_i32_2 = arith.constant 0 : i32
    return %c0_i32, %c0_i32_0, %c0_i32_1 : i32, i32, i32
  }
  func.func @transform_4(%arg0: i32) -> (i32, i32, i32) {
    %c0_i32 = arith.constant 0 : i32
    %c0_i32_0 = arith.constant 0 : i32
    %c0_i32_1 = arith.constant 0 : i32
    %c0_i32_2 = arith.constant 0 : i32
    return %c0_i32, %c0_i32_0, %c0_i32_1 : i32, i32, i32
  }
  func.func @transform_5(%arg0: i32) -> (i32, i32) {
    %c0_i32 = arith.constant 0 : i32
    %c0_i32_0 = arith.constant 0 : i32
    %c0_i32_1 = arith.constant 0 : i32
    return %c0_i32, %c0_i32_0 : i32, i32
  }
  func.func @transform_6(%arg0: i32) -> (i32, i32) {
    %c0_i32 = arith.constant 0 : i32
    %c0_i32_0 = arith.constant 0 : i32
    %c0_i32_1 = arith.constant 0 : i32
    return %c0_i32, %c0_i32_0 : i32, i32
  }
  func.func @transform_7(%arg0: i32) -> (i32, i32) {
    %c0_i32 = arith.constant 0 : i32
    %c0_i32_0 = arith.constant 0 : i32
    return %arg0, %c0_i32 : i32, i32
  }
}

module attributes {stable_mosaic.version = 11 : i64} {
  func.func @_mlp_kernel(%arg0: i32, %arg1: memref<16x128xbf16, #tpu.memory_space<vmem>>, %arg2: memref<128x128xbf16, #tpu.memory_space<vmem>>, %arg3: memref<1x128xf32, #tpu.memory_space<vmem>>, %arg4: memref<6x128x128xbf16, #tpu.memory_space<vmem>>, %arg5: memref<6x1x128xf32, #tpu.memory_space<vmem>>, %arg6: memref<128x128xbf16, #tpu.memory_space<vmem>>, %arg7: memref<1x128xf32, #tpu.memory_space<vmem>>, %arg8: memref<16x128xf32, #tpu.memory_space<vmem>>) attributes {dimension_semantics = [#tpu.dimension_semantics<parallel>], iteration_bounds = array<i64: 2>, scalar_prefetch = 0 : i64, scratch_operands = 0 : i64, tpu.core_type = #tpu.core_type<tc>, window_params = [{transform_indices = @transform_0, window_bounds = array<i64: 16, 128>}, {pipeline_mode = #tpu.pipeline_mode<synchronous>, transform_indices = @transform_1, window_bounds = array<i64: 128, 128>}, {pipeline_mode = #tpu.pipeline_mode<synchronous>, transform_indices = @transform_2, window_bounds = array<i64: 1, 128>}, {pipeline_mode = #tpu.pipeline_mode<synchronous>, transform_indices = @transform_3, window_bounds = array<i64: 6, 128, 128>}, {pipeline_mode = #tpu.pipeline_mode<synchronous>, transform_indices = @transform_4, window_bounds = array<i64: 6, 1, 128>}, {pipeline_mode = #tpu.pipeline_mode<synchronous>, transform_indices = @transform_5, window_bounds = array<i64: 128, 128>}, {pipeline_mode = #tpu.pipeline_mode<synchronous>, transform_indices = @transform_6, window_bounds = array<i64: 1, 128>}, {transform_indices = @transform_7, window_bounds = array<i64: 16, 128>}]} {
    %c0 = arith.constant 0 : index
    %c0_0 = arith.constant 0 : index
    %0 = vector.load %arg1[%c0, %c0_0] : memref<16x128xbf16, #tpu.memory_space<vmem>>, vector<16x128xbf16>
    %c0_1 = arith.constant 0 : index
    %c0_2 = arith.constant 0 : index
    %1 = vector.load %arg2[%c0_1, %c0_2] : memref<128x128xbf16, #tpu.memory_space<vmem>>, vector<128x128xbf16>
    %cst = arith.constant dense<0.000000e+00> : vector<16x128xf32>
    %2 = tpu.matmul %0, %1, %cst {dimension_numbers = #tpu.dot_dimension_numbers<[1], [0], [0], [1], [0, 0, 1, 1], [], []>} : vector<16x128xbf16>, vector<128x128xbf16>, vector<16x128xf32> -> vector<16x128xf32>
    %c0_3 = arith.constant 0 : index
    %c0_4 = arith.constant 0 : index
    %3 = vector.load %arg3[%c0_3, %c0_4] : memref<1x128xf32, #tpu.memory_space<vmem>>, vector<1x128xf32>
    %4 = vector.broadcast %3 : vector<1x128xf32> to vector<16x128xf32>
    %5 = arith.addf %2, %4 : vector<16x128xf32>
    %cst_5 = arith.constant 0.000000e+00 : f32
    %6 = vector.broadcast %cst_5 : f32 to vector<16x128xf32>
    %7 = arith.maximumf %5, %6 : vector<16x128xf32>
    %c0_6 = arith.constant 0 : index
    %c0_7 = arith.constant 0 : index
    %c0_8 = arith.constant 0 : index
    %8 = vector.load %arg4[%c0_6, %c0_7, %c0_8] : memref<6x128x128xbf16, #tpu.memory_space<vmem>>, vector<1x128x128xbf16>
    %9 = vector.shape_cast %8 : vector<1x128x128xbf16> to vector<128x128xbf16>
    %c0_9 = arith.constant 0 : index
    %c0_10 = arith.constant 0 : index
    %c0_11 = arith.constant 0 : index
    %10 = vector.load %arg5[%c0_9, %c0_10, %c0_11] : memref<6x1x128xf32, #tpu.memory_space<vmem>>, vector<1x1x128xf32>
    %11 = vector.shape_cast %10 : vector<1x1x128xf32> to vector<1x128xf32>
    %12 = arith.truncf %7 : vector<16x128xf32> to vector<16x128xbf16>
    %cst_12 = arith.constant dense<0.000000e+00> : vector<16x128xf32>
    %13 = tpu.matmul %12, %9, %cst_12 {dimension_numbers = #tpu.dot_dimension_numbers<[1], [0], [0], [1], [0, 0, 1, 1], [], []>} : vector<16x128xbf16>, vector<128x128xbf16>, vector<16x128xf32> -> vector<16x128xf32>
    %14 = vector.broadcast %11 : vector<1x128xf32> to vector<16x128xf32>
    %15 = arith.addf %13, %14 : vector<16x128xf32>
    %cst_13 = arith.constant 0.000000e+00 : f32
    %16 = vector.broadcast %cst_13 : f32 to vector<16x128xf32>
    %17 = arith.maximumf %15, %16 : vector<16x128xf32>
    %c1 = arith.constant 1 : index
    %c0_14 = arith.constant 0 : index
    %c0_15 = arith.constant 0 : index
    %18 = vector.load %arg4[%c1, %c0_14, %c0_15] : memref<6x128x128xbf16, #tpu.memory_space<vmem>>, vector<1x128x128xbf16>
    %19 = vector.shape_cast %18 : vector<1x128x128xbf16> to vector<128x128xbf16>
    %c1_16 = arith.constant 1 : index
    %c0_17 = arith.constant 0 : index
    %c0_18 = arith.constant 0 : index
    %20 = vector.load %arg5[%c1_16, %c0_17, %c0_18] : memref<6x1x128xf32, #tpu.memory_space<vmem>>, vector<1x1x128xf32>
    %21 = vector.shape_cast %20 : vector<1x1x128xf32> to vector<1x128xf32>
    %22 = arith.truncf %17 : vector<16x128xf32> to vector<16x128xbf16>
    %cst_19 = arith.constant dense<0.000000e+00> : vector<16x128xf32>
    %23 = tpu.matmul %22, %19, %cst_19 {dimension_numbers = #tpu.dot_dimension_numbers<[1], [0], [0], [1], [0, 0, 1, 1], [], []>} : vector<16x128xbf16>, vector<128x128xbf16>, vector<16x128xf32> -> vector<16x128xf32>
    %24 = vector.broadcast %21 : vector<1x128xf32> to vector<16x128xf32>
    %25 = arith.addf %23, %24 : vector<16x128xf32>
    %cst_20 = arith.constant 0.000000e+00 : f32
    %26 = vector.broadcast %cst_20 : f32 to vector<16x128xf32>
    %27 = arith.maximumf %25, %26 : vector<16x128xf32>
    %c2 = arith.constant 2 : index
    %c0_21 = arith.constant 0 : index
    %c0_22 = arith.constant 0 : index
    %28 = vector.load %arg4[%c2, %c0_21, %c0_22] : memref<6x128x128xbf16, #tpu.memory_space<vmem>>, vector<1x128x128xbf16>
    %29 = vector.shape_cast %28 : vector<1x128x128xbf16> to vector<128x128xbf16>
    %c2_23 = arith.constant 2 : index
    %c0_24 = arith.constant 0 : index
    %c0_25 = arith.constant 0 : index
    %30 = vector.load %arg5[%c2_23, %c0_24, %c0_25] : memref<6x1x128xf32, #tpu.memory_space<vmem>>, vector<1x1x128xf32>
    %31 = vector.shape_cast %30 : vector<1x1x128xf32> to vector<1x128xf32>
    %32 = arith.truncf %27 : vector<16x128xf32> to vector<16x128xbf16>
    %cst_26 = arith.constant dense<0.000000e+00> : vector<16x128xf32>
    %33 = tpu.matmul %32, %29, %cst_26 {dimension_numbers = #tpu.dot_dimension_numbers<[1], [0], [0], [1], [0, 0, 1, 1], [], []>} : vector<16x128xbf16>, vector<128x128xbf16>, vector<16x128xf32> -> vector<16x128xf32>
    %34 = vector.broadcast %31 : vector<1x128xf32> to vector<16x128xf32>
    %35 = arith.addf %33, %34 : vector<16x128xf32>
    %cst_27 = arith.constant 0.000000e+00 : f32
    %36 = vector.broadcast %cst_27 : f32 to vector<16x128xf32>
    %37 = arith.maximumf %35, %36 : vector<16x128xf32>
    %c3 = arith.constant 3 : index
    %c0_28 = arith.constant 0 : index
    %c0_29 = arith.constant 0 : index
    %38 = vector.load %arg4[%c3, %c0_28, %c0_29] : memref<6x128x128xbf16, #tpu.memory_space<vmem>>, vector<1x128x128xbf16>
    %39 = vector.shape_cast %38 : vector<1x128x128xbf16> to vector<128x128xbf16>
    %c3_30 = arith.constant 3 : index
    %c0_31 = arith.constant 0 : index
    %c0_32 = arith.constant 0 : index
    %40 = vector.load %arg5[%c3_30, %c0_31, %c0_32] : memref<6x1x128xf32, #tpu.memory_space<vmem>>, vector<1x1x128xf32>
    %41 = vector.shape_cast %40 : vector<1x1x128xf32> to vector<1x128xf32>
    %42 = arith.truncf %37 : vector<16x128xf32> to vector<16x128xbf16>
    %cst_33 = arith.constant dense<0.000000e+00> : vector<16x128xf32>
    %43 = tpu.matmul %42, %39, %cst_33 {dimension_numbers = #tpu.dot_dimension_numbers<[1], [0], [0], [1], [0, 0, 1, 1], [], []>} : vector<16x128xbf16>, vector<128x128xbf16>, vector<16x128xf32> -> vector<16x128xf32>
    %44 = vector.broadcast %41 : vector<1x128xf32> to vector<16x128xf32>
    %45 = arith.addf %43, %44 : vector<16x128xf32>
    %cst_34 = arith.constant 0.000000e+00 : f32
    %46 = vector.broadcast %cst_34 : f32 to vector<16x128xf32>
    %47 = arith.maximumf %45, %46 : vector<16x128xf32>
    %c4 = arith.constant 4 : index
    %c0_35 = arith.constant 0 : index
    %c0_36 = arith.constant 0 : index
    %48 = vector.load %arg4[%c4, %c0_35, %c0_36] : memref<6x128x128xbf16, #tpu.memory_space<vmem>>, vector<1x128x128xbf16>
    %49 = vector.shape_cast %48 : vector<1x128x128xbf16> to vector<128x128xbf16>
    %c4_37 = arith.constant 4 : index
    %c0_38 = arith.constant 0 : index
    %c0_39 = arith.constant 0 : index
    %50 = vector.load %arg5[%c4_37, %c0_38, %c0_39] : memref<6x1x128xf32, #tpu.memory_space<vmem>>, vector<1x1x128xf32>
    %51 = vector.shape_cast %50 : vector<1x1x128xf32> to vector<1x128xf32>
    %52 = arith.truncf %47 : vector<16x128xf32> to vector<16x128xbf16>
    %cst_40 = arith.constant dense<0.000000e+00> : vector<16x128xf32>
    %53 = tpu.matmul %52, %49, %cst_40 {dimension_numbers = #tpu.dot_dimension_numbers<[1], [0], [0], [1], [0, 0, 1, 1], [], []>} : vector<16x128xbf16>, vector<128x128xbf16>, vector<16x128xf32> -> vector<16x128xf32>
    %54 = vector.broadcast %51 : vector<1x128xf32> to vector<16x128xf32>
    %55 = arith.addf %53, %54 : vector<16x128xf32>
    %cst_41 = arith.constant 0.000000e+00 : f32
    %56 = vector.broadcast %cst_41 : f32 to vector<16x128xf32>
    %57 = arith.maximumf %55, %56 : vector<16x128xf32>
    %c5 = arith.constant 5 : index
    %c0_42 = arith.constant 0 : index
    %c0_43 = arith.constant 0 : index
    %58 = vector.load %arg4[%c5, %c0_42, %c0_43] : memref<6x128x128xbf16, #tpu.memory_space<vmem>>, vector<1x128x128xbf16>
    %59 = vector.shape_cast %58 : vector<1x128x128xbf16> to vector<128x128xbf16>
    %c5_44 = arith.constant 5 : index
    %c0_45 = arith.constant 0 : index
    %c0_46 = arith.constant 0 : index
    %60 = vector.load %arg5[%c5_44, %c0_45, %c0_46] : memref<6x1x128xf32, #tpu.memory_space<vmem>>, vector<1x1x128xf32>
    %61 = vector.shape_cast %60 : vector<1x1x128xf32> to vector<1x128xf32>
    %62 = arith.truncf %57 : vector<16x128xf32> to vector<16x128xbf16>
    %cst_47 = arith.constant dense<0.000000e+00> : vector<16x128xf32>
    %63 = tpu.matmul %62, %59, %cst_47 {dimension_numbers = #tpu.dot_dimension_numbers<[1], [0], [0], [1], [0, 0, 1, 1], [], []>} : vector<16x128xbf16>, vector<128x128xbf16>, vector<16x128xf32> -> vector<16x128xf32>
    %64 = vector.broadcast %61 : vector<1x128xf32> to vector<16x128xf32>
    %65 = arith.addf %63, %64 : vector<16x128xf32>
    %cst_48 = arith.constant 0.000000e+00 : f32
    %66 = vector.broadcast %cst_48 : f32 to vector<16x128xf32>
    %67 = arith.maximumf %65, %66 : vector<16x128xf32>
    %68 = arith.truncf %67 : vector<16x128xf32> to vector<16x128xbf16>
    %c0_49 = arith.constant 0 : index
    %c0_50 = arith.constant 0 : index
    %69 = vector.load %arg6[%c0_49, %c0_50] : memref<128x128xbf16, #tpu.memory_space<vmem>>, vector<128x128xbf16>
    %cst_51 = arith.constant dense<0.000000e+00> : vector<16x128xf32>
    %70 = tpu.matmul %68, %69, %cst_51 {dimension_numbers = #tpu.dot_dimension_numbers<[1], [0], [0], [1], [0, 0, 1, 1], [], []>} : vector<16x128xbf16>, vector<128x128xbf16>, vector<16x128xf32> -> vector<16x128xf32>
    %c0_52 = arith.constant 0 : index
    %c0_53 = arith.constant 0 : index
    %71 = vector.load %arg7[%c0_52, %c0_53] : memref<1x128xf32, #tpu.memory_space<vmem>>, vector<1x128xf32>
    %72 = vector.broadcast %71 : vector<1x128xf32> to vector<16x128xf32>
    %73 = arith.addf %70, %72 : vector<16x128xf32>
    %c0_54 = arith.constant 0 : index
    %c0_55 = arith.constant 0 : index
    %74 = vector.load %arg8[%c0_54, %c0_55] : memref<16x128xf32, #tpu.memory_space<vmem>>, vector<16x128xf32>
    tpu.vector_store %arg8[%c0_54, %c0_55], %73 {strides = array<i32>} : memref<16x128xf32, #tpu.memory_space<vmem>>, vector<16x128xf32>,
    return
  }
  func.func @transform_0(%arg0: i32) -> (i32, i32) {
    %c0_i32 = arith.constant 0 : i32
    %c0_i32_0 = arith.constant 0 : i32
    return %arg0, %c0_i32 : i32, i32
  }
  func.func @transform_1(%arg0: i32) -> (i32, i32) {
    %c0_i32 = arith.constant 0 : i32
    %c0_i32_0 = arith.constant 0 : i32
    %c0_i32_1 = arith.constant 0 : i32
    return %c0_i32, %c0_i32_0 : i32, i32
  }
  func.func @transform_2(%arg0: i32) -> (i32, i32) {
    %c0_i32 = arith.constant 0 : i32
    %c0_i32_0 = arith.constant 0 : i32
    %c0_i32_1 = arith.constant 0 : i32
    return %c0_i32, %c0_i32_0 : i32, i32
  }
  func.func @transform_3(%arg0: i32) -> (i32, i32, i32) {
    %c0_i32 = arith.constant 0 : i32
    %c0_i32_0 = arith.constant 0 : i32
    %c0_i32_1 = arith.constant 0 : i32
    %c0_i32_2 = arith.constant 0 : i32
    return %c0_i32, %c0_i32_0, %c0_i32_1 : i32, i32, i32
  }
  func.func @transform_4(%arg0: i32) -> (i32, i32, i32) {
    %c0_i32 = arith.constant 0 : i32
    %c0_i32_0 = arith.constant 0 : i32
    %c0_i32_1 = arith.constant 0 : i32
    %c0_i32_2 = arith.constant 0 : i32
    return %c0_i32, %c0_i32_0, %c0_i32_1 : i32, i32, i32
  }
  func.func @transform_5(%arg0: i32) -> (i32, i32) {
    %c0_i32 = arith.constant 0 : i32
    %c0_i32_0 = arith.constant 0 : i32
    %c0_i32_1 = arith.constant 0 : i32
    return %c0_i32, %c0_i32_0 : i32, i32
  }
  func.func @transform_6(%arg0: i32) -> (i32, i32) {
    %c0_i32 = arith.constant 0 : i32
    %c0_i32_0 = arith.constant 0 : i32
    %c0_i32_1 = arith.constant 0 : i32
    return %c0_i32, %c0_i32_0 : i32, i32
  }
  func.func @transform_7(%arg0: i32) -> (i32, i32) {
    %c0_i32 = arith.constant 0 : i32
    %c0_i32_0 = arith.constant 0 : i32
    return %arg0, %c0_i32 : i32, i32
  }
}

</mosaic_0001>

<llo_original>
// kernel: tpu_custom_call.1
$region0: #{tpu_custom_call.1}
  #allocation0 [shape = 'u32[]', space=smem, size = 0x4, offset = 0x4, fixed_abs, tag = 'smem constant byte address 0x4 - core index']
  #allocation1 [shape = 'u32[144,128]{1,0:T(1,128)}', space=vmem, size = 0x12000, scoped, tag = 'internal scratch']
  %s0 = inlined_call_operand.hbm [shape: bf16[32,128], index: 0, kind: input, shape index: {}]
  %s1 = inlined_call_operand.hbm [shape: bf16[128,128], index: 1, kind: input, shape index: {}]
  %s2 = inlined_call_operand.vmem [shape: f32[1,128], index: 2, kind: input, shape index: {}]
  %s3 = inlined_call_operand.hbm [shape: bf16[6,128,128], index: 3, kind: input, shape index: {}]
  %s4 = inlined_call_operand.vmem [shape: f32[6,1,128], index: 4, kind: input, shape index: {}]
  %s5 = inlined_call_operand.hbm [shape: bf16[128,128], index: 5, kind: input, shape index: {}]
  %s6 = inlined_call_operand.vmem [shape: f32[1,128], index: 6, kind: input, shape index: {}]
  %s7 = inlined_call_operand.hbm [shape: f32[32,128], index: 7, kind: output, shape index: {}]
  %s8 = sld [smem:[#allocation0]]
  $region77: #{tpu_custom_call.1} parent=0
    _
  %s10 = ssub.s32 1, %s8
  %s11 = scalar_select 0, %s10, %s8
  $region1: #{tpu_custom_call.1} parent=0
    #allocation2 [shape = 'u8[8192]{0}', space=vmem, size = 0x2000, scoped, tag = 'input window, operand 0']
    #allocation3 [shape = 's32[2]{0}', space=sflag, size = 0x8, scoped, tag = 'scoped memory for tpu_custom_call.1']
    #allocation4 [shape = 's32[2]{0}', space=sflag, size = 0x8, scoped, tag = 'scoped memory for tpu_custom_call.1']
    #allocation5 [shape = 'u8[32768]{0}', space=vmem, size = 0x8000, scoped, tag = 'input window, operand 1, single buffered']
    #allocation6 [shape = 's32[1]{0}', space=sflag, size = 0x4, scoped, tag = 'scoped memory for tpu_custom_call.1']
    #allocation7 [shape = 'u8[196608]{0}', space=vmem, size = 0x30000, scoped, tag = 'input window, operand 3, single buffered']
    #allocation8 [shape = 'u8[32768]{0}', space=vmem, size = 0x8000, scoped, tag = 'input window, operand 5, single buffered']
    #allocation9 [shape = 's32[1]{0}', space=sflag, size = 0x4, scoped, tag = 'scoped memory for tpu_custom_call.1']
    #allocation10 [shape = 'u8[16384]{0}', space=vmem, size = 0x4000, scoped, tag = 'output window, operand 0']
    %12 = vsyncpa [#allocation3], 0
    %s13 = scalar_lea.sflag [#allocation3], 1
    %14 = vsyncpa %s13, 0
    %15 = vsyncpa [#allocation6], 0
    %16 = vsyncpa [#allocation9], 0
    %17 = vsyncpa [#allocation4], 0
    %s18 = scalar_lea.sflag [#allocation4], 1
    %19 = vsyncpa %s18, 0
    loop: start=0, step=1, limit=4
    $region2: #{tpu_custom_call.1} parent=1 // loop_pre_header
      _
    $region3: #{tpu_custom_call.1} parent=1 // loop_header
      %s21 = sphi 0, %s25
      %p22 = scmp.ge.s32.totalorder %s21, 4
      %s31 = sphi 0, %s33
      %s34 = sphi 0, %s31
      %s35 = sphi 0, %s34
      %s51 = sphi 0, %s35
      %s55 = sphi 0, %s55
      %s57 = sphi 0, %s55
      %s58 = sphi 0, %s57
      %s72 = sphi 0, %s58
      %s76 = sphi 0, %s76
      %s78 = sphi 0, %s76
      %s79 = sphi 0, %s78
      %s93 = sphi 0, %s79
      %s97 = sphi 0, %s97
      %s99 = sphi 0, %s97
      %s100 = sphi 0, %s99
      %s114 = sphi 0, %s100
      %s118 = sphi 0, %s118
      %s120 = sphi 0, %s118
      %s121 = sphi 0, %s120
      %s135 = sphi 0, %s121
      %s139 = sphi 0, %s139
      %s141 = sphi 0, %s139
      %s142 = sphi 0, %s141
      %s156 = sphi 0, %s142
      %s160 = sphi 0, %s160
      %s162 = sphi 0, %s160
      %s163 = sphi 0, %s162
      %s177 = sphi 0, %s163
      %s183 = sphi 0, %s185
      %s186 = sphi 0, %s183
      %s187 = sphi 0, %s186
      %s203 = sphi 0, %s187
    $region4: #{tpu_custom_call.1} parent=1 // loop_header_branch
      %24 = sbr.rel (%p22) target = $region8
    $region5: #{tpu_custom_call.1} parent=1 // loop_body
      %s26 = ssub.s32 %s21, 1
      %s27 = ssub.s32 %s21, 2
      %s28 = sadd.s32 %s21, 1
      %s29 = ssub.s32 %s21, %s28
      %p30 = scmp.eq.s32.totalorder %s29, 0
      %s32 = sadd.s32 %s31, 1
      %s33 = scalar_select %p30, %s31, %s32
      %p36 = pneg %p30
      %p37 = scmp.eq.s32.totalorder %s21, 1
      %p38 = por %p36, %p37
      %p39 = scmp.ne.s32.totalorder %s31, %s34
      %p40 = scmp.eq.s32.totalorder %s21, 0
      %p41 = por %p39, %p40
      %p42 = scmp.ne.s32.totalorder %s31, %s34
      %p43 = scmp.eq.s32.totalorder %s26, 1
      %p44 = por %p42, %p43
      %p45 = scmp.ne.s32.totalorder %s34, %s35
      %p46 = scmp.eq.s32.totalorder %s26, 0
      %p47 = por %p45, %p46
      %p48 = scmp.ne.s32.totalorder %s34, %s35
      %p49 = scmp.eq.s32.totalorder %s27, 1
      %p50 = por %p48, %p49
      %p52 = scmp.ne.s32.totalorder %s35, %s51
      %p53 = scmp.eq.s32.totalorder %s27, 0
      %p54 = por %p52, %p53
      %s56 = sadd.s32 %s55, 1
      %p59 = scmp.eq.s32.totalorder %s21, 1
      %p60 = scmp.ne.s32.totalorder %s55, %s57
      %p61 = scmp.eq.s32.totalorder %s21, 0
      %p62 = por %p60, %p61
      %p63 = scmp.ne.s32.totalorder %s55, %s57
      %p64 = scmp.eq.s32.totalorder %s26, 1
      %p65 = por %p63, %p64
      %p66 = scmp.ne.s32.totalorder %s57, %s58
      %p67 = scmp.eq.s32.totalorder %s26, 0
      %p68 = por %p66, %p67
      %p69 = scmp.ne.s32.totalorder %s57, %s58
      %p70 = scmp.eq.s32.totalorder %s27, 1
      %p71 = por %p69, %p70
      %p73 = scmp.ne.s32.totalorder %s58, %s72
      %p74 = scmp.eq.s32.totalorder %s27, 0
      %p75 = por %p73, %p74
      %s77 = sadd.s32 %s76, 1
      %p80 = scmp.eq.s32.totalorder %s21, 1
      %p81 = scmp.ne.s32.totalorder %s76, %s78
      %p82 = scmp.eq.s32.totalorder %s21, 0
      %p83 = por %p81, %p82
      %p84 = scmp.ne.s32.totalorder %s76, %s78
      %p85 = scmp.eq.s32.totalorder %s26, 1
      %p86 = por %p84, %p85
      %p87 = scmp.ne.s32.totalorder %s78, %s79
      %p88 = scmp.eq.s32.totalorder %s26, 0
      %p89 = por %p87, %p88
      %p90 = scmp.ne.s32.totalorder %s78, %s79
      %p91 = scmp.eq.s32.totalorder %s27, 1
      %p92 = por %p90, %p91
      %p94 = scmp.ne.s32.totalorder %s79, %s93
      %p95 = scmp.eq.s32.totalorder %s27, 0
      %p96 = por %p94, %p95
      %s98 = sadd.s32 %s97, 1
      %p101 = scmp.eq.s32.totalorder %s21, 1
      %p102 = scmp.ne.s32.totalorder %s97, %s99
      %p103 = scmp.eq.s32.totalorder %s21, 0
      %p104 = por %p102, %p103
      %p105 = scmp.ne.s32.totalorder %s97, %s99
      %p106 = scmp.eq.s32.totalorder %s26, 1
      %p107 = por %p105, %p106
      %p108 = scmp.ne.s32.totalorder %s99, %s100
      %p109 = scmp.eq.s32.totalorder %s26, 0
      %p110 = por %p108, %p109
      %p111 = scmp.ne.s32.totalorder %s99, %s100
      %p112 = scmp.eq.s32.totalorder %s27, 1
      %p113 = por %p111, %p112
      %p115 = scmp.ne.s32.totalorder %s100, %s114
      %p116 = scmp.eq.s32.totalorder %s27, 0
      %p117 = por %p115, %p116
      %s119 = sadd.s32 %s118, 1
      %p122 = scmp.eq.s32.totalorder %s21, 1
      %p123 = scmp.ne.s32.totalorder %s118, %s120
      %p124 = scmp.eq.s32.totalorder %s21, 0
      %p125 = por %p123, %p124
      %p126 = scmp.ne.s32.totalorder %s118, %s120
      %p127 = scmp.eq.s32.totalorder %s26, 1
      %p128 = por %p126, %p127
      %p129 = scmp.ne.s32.totalorder %s120, %s121
      %p130 = scmp.eq.s32.totalorder %s26, 0
      %p131 = por %p129, %p130
      %p132 = scmp.ne.s32.totalorder %s120, %s121
      %p133 = scmp.eq.s32.totalorder %s27, 1
      %p134 = por %p132, %p133
      %p136 = scmp.ne.s32.totalorder %s121, %s135
      %p137 = scmp.eq.s32.totalorder %s27, 0
      %p138 = por %p136, %p137
      %s140 = sadd.s32 %s139, 1
      %p143 = scmp.eq.s32.totalorder %s21, 1
      %p144 = scmp.ne.s32.totalorder %s139, %s141
      %p145 = scmp.eq.s32.totalorder %s21, 0
      %p146 = por %p144, %p145
      %p147 = scmp.ne.s32.totalorder %s139, %s141
      %p148 = scmp.eq.s32.totalorder %s26, 1
      %p149 = por %p147, %p148
      %p150 = scmp.ne.s32.totalorder %s141, %s142
      %p151 = scmp.eq.s32.totalorder %s26, 0
      %p152 = por %p150, %p151
      %p153 = scmp.ne.s32.totalorder %s141, %s142
      %p154 = scmp.eq.s32.totalorder %s27, 1
      %p155 = por %p153, %p154
      %p157 = scmp.ne.s32.totalorder %s142, %s156
      %p158 = scmp.eq.s32.totalorder %s27, 0
      %p159 = por %p157, %p158
      %s161 = sadd.s32 %s160, 1
      %p164 = scmp.eq.s32.totalorder %s21, 1
      %p165 = scmp.ne.s32.totalorder %s160, %s162
      %p166 = scmp.eq.s32.totalorder %s21, 0
      %p167 = por %p165, %p166
      %p168 = scmp.ne.s32.totalorder %s160, %s162
      %p169 = scmp.eq.s32.totalorder %s26, 1
      %p170 = por %p168, %p169
      %p171 = scmp.ne.s32.totalorder %s162, %s163
      %p172 = scmp.eq.s32.totalorder %s26, 0
      %p173 = por %p171, %p172
      %p174 = scmp.ne.s32.totalorder %s162, %s163
      %p175 = scmp.eq.s32.totalorder %s27, 1
      %p176 = por %p174, %p175
      %p178 = scmp.ne.s32.totalorder %s163, %s177
      %p179 = scmp.eq.s32.totalorder %s27, 0
      %p180 = por %p178, %p179
      %s181 = ssub.s32 %s21, %s28
      %p182 = scmp.eq.s32.totalorder %s181, 0
      %s184 = sadd.s32 %s183, 1
      %s185 = scalar_select %p182, %s183, %s184
      %p188 = pneg %p182
      %p189 = scmp.eq.s32.totalorder %s21, 1
      %p190 = por %p188, %p189
      %p191 = scmp.ne.s32.totalorder %s183, %s186
      %p192 = scmp.eq.s32.totalorder %s21, 0
      %p193 = por %p191, %p192
      %p194 = scmp.ne.s32.totalorder %s183, %s186
      %p195 = scmp.eq.s32.totalorder %s26, 1
      %p196 = por %p194, %p195
      %p197 = scmp.ne.s32.totalorder %s186, %s187
      %p198 = scmp.eq.s32.totalorder %s26, 0
      %p199 = por %p197, %p198
      %p200 = scmp.ne.s32.totalorder %s186, %s187
      %p201 = scmp.eq.s32.totalorder %s27, 1
      %p202 = por %p200, %p201
      %p204 = scmp.ne.s32.totalorder %s187, %s203
      %p205 = scmp.eq.s32.totalorder %s27, 0
      %p206 = por %p204, %p205
      %p207 = scmp.le.s32.totalorder 1, %s21
      %p208 = scmp.lt.s32.totalorder %s21, 3
      %p209 = pnand %p207, %p208
      %p210 = pneg %p209
      // Predicated region
      $region9: #{tpu_custom_call.1} parent=5 // pred_check
        _
      $region10: #{tpu_custom_call.1} parent=5 // pred_check_branch
        %212 = sbr.rel (%p209) target = $region12
      $region11: #{tpu_custom_call.1} parent=5 // pred_region
        %s213 = ssub.s32 %s21, 1
        // Predicated region
        $region13: #{tpu_custom_call.1} parent=11 // pred_check
          %p214 = pneg %p68
        $region14: #{tpu_custom_call.1} parent=11 // pred_check_branch
          %216 = sbr.rel (%p214) target = $region16
        $region15: #{tpu_custom_call.1} parent=11 // pred_region
          %s218 = ssub.s32 1024, 1024
          %219 = vsyncadd [#allocation6], %s218
          %s220 = sshll.u32 [#allocation5], 4
          %s221 = int_to_ptr.vmem [resolvable:$true] %s220
          %226 = dma.hbm_to_vmem [thread:$0]  %s1, 1024, %s221, [#allocation6], 64, 64, 4
        $region16: #{tpu_custom_call.1} parent=11 // pred_fallthru
          _
        // Predicated region
        $region17: #{tpu_custom_call.1} parent=11 // pred_check
          %p227 = pneg %p89
        $region18: #{tpu_custom_call.1} parent=11 // pred_check_branch
          %229 = sbr.rel (%p227) target = $region20
        $region19: #{tpu_custom_call.1} parent=11 // pred_region
          _
        $region20: #{tpu_custom_call.1} parent=11 // pred_fallthru
          _
        // Predicated region
        $region21: #{tpu_custom_call.1} parent=11 // pred_check
          %p230 = pneg %p110
        $region22: #{tpu_custom_call.1} parent=11 // pred_check_branch
          %232 = sbr.rel (%p230) target = $region24
        $region23: #{tpu_custom_call.1} parent=11 // pred_region
          %s234 = ssub.s32 6144, 6144
          %235 = vsyncadd [#allocation6], %s234
          %s236 = sshll.u32 [#allocation7], 4
          %s237 = int_to_ptr.vmem [resolvable:$true] %s236
          %242 = dma.hbm_to_vmem [thread:$0]  %s3, 6144, %s237, [#allocation6], 64, 64, 4
        $region24: #{tpu_custom_call.1} parent=11 // pred_fallthru
          _
        // Predicated region
        $region25: #{tpu_custom_call.1} parent=11 // pred_check
          %p243 = pneg %p131
        $region26: #{tpu_custom_call.1} parent=11 // pred_check_branch
          %245 = sbr.rel (%p243) target = $region28
        $region27: #{tpu_custom_call.1} parent=11 // pred_region
          _
        $region28: #{tpu_custom_call.1} parent=11 // pred_fallthru
          _
        // Predicated region
        $region29: #{tpu_custom_call.1} parent=11 // pred_check
          %p246 = pneg %p152
        $region30: #{tpu_custom_call.1} parent=11 // pred_check_branch
          %248 = sbr.rel (%p246) target = $region32
        $region31: #{tpu_custom_call.1} parent=11 // pred_region
          %s250 = ssub.s32 1024, 1024
          %251 = vsyncadd [#allocation9], %s250
          %s252 = sshll.u32 [#allocation8], 4
          %s253 = int_to_ptr.vmem [resolvable:$true] %s252
          %258 = dma.hbm_to_vmem [thread:$0]  %s5, 1024, %s253, [#allocation9], 64, 64, 4
        $region32: #{tpu_custom_call.1} parent=11 // pred_fallthru
          _
        // Predicated region
        $region33: #{tpu_custom_call.1} parent=11 // pred_check
          %p259 = pneg %p173
        $region34: #{tpu_custom_call.1} parent=11 // pred_check_branch
          %261 = sbr.rel (%p259) target = $region36
        $region35: #{tpu_custom_call.1} parent=11 // pred_region
          _
        $region36: #{tpu_custom_call.1} parent=11 // pred_fallthru
          _
      $region12: #{tpu_custom_call.1} parent=5 // pred_fallthru
        _
      %p262 = scmp.lt.s32.totalorder %s21, 2
      // Predicated region
      $region37: #{tpu_custom_call.1} parent=5 // pred_check
        %p263 = pneg %p262
      $region38: #{tpu_custom_call.1} parent=5 // pred_check_branch
        %265 = sbr.rel (%p263) target = $region40
      $region39: #{tpu_custom_call.1} parent=5 // pred_region
        // Predicated region
        $region41: #{tpu_custom_call.1} parent=39 // pred_check
          %p266 = pneg %p41
        $region42: #{tpu_custom_call.1} parent=39 // pred_check_branch
          %268 = sbr.rel (%p266) target = $region44
        $region43: #{tpu_custom_call.1} parent=39 // pred_region
          %s269 = sand.u32 %s31, 1
          %s270 = scalar_lea.sflag [#allocation3], %s269
          %s271 = sand.u32 %s31, 1
          %s272 = smul.addr %s271, 8
          %s273 = scalar_lea.vmem [#allocation2], %s272
          %s274 = smul.u32 2, %s21
          %s276 = ssub.s32 128, 128
          %277 = vsyncadd %s270, %s276
          %s278 = smul.addr %s274, 64
          %s279 = scalar_lea.hbm %s0, %s278
          %s280 = sshll.u32 %s273, 4
          %s281 = int_to_ptr.vmem [resolvable:$true] %s280
          %286 = dma.hbm_to_vmem [thread:$0]  %s279, 128, %s281, %s270, 64, 64, 4
        $region44: #{tpu_custom_call.1} parent=39 // pred_fallthru
          _
      $region40: #{tpu_custom_call.1} parent=5 // pred_fallthru
        _
      %p287 = scmp.le.s32.totalorder 1, %s21
      %p288 = scmp.lt.s32.totalorder %s21, 3
      %p289 = pnand %p287, %p288
      %p290 = pneg %p289
      // Predicated region
      $region45: #{tpu_custom_call.1} parent=5 // pred_check
        _
      $region46: #{tpu_custom_call.1} parent=5 // pred_check_branch
        %292 = sbr.rel (%p289) target = $region48
      $region47: #{tpu_custom_call.1} parent=5 // pred_region
        %s293 = ssub.s32 %s21, 1
        %s294 = sand.u32 %s34, 1
        %s295 = scalar_lea.sflag [#allocation3], %s294
        %s296 = sand.u32 %s34, 1
        %s297 = smul.addr %s296, 8
        %s298 = scalar_lea.vmem [#allocation2], %s297
        // Predicated region
        $region49: #{tpu_custom_call.1} parent=47 // pred_check
          %p299 = pneg %p47
        $region50: #{tpu_custom_call.1} parent=47 // pred_check_branch
          %301 = sbr.rel (%p299) target = $region52
        $region51: #{tpu_custom_call.1} parent=47 // pred_region
          %302 = dma.done %s295, 128
        $region52: #{tpu_custom_call.1} parent=47 // pred_fallthru
          _
        // Predicated region
        $region53: #{tpu_custom_call.1} parent=47 // pred_check
          %p303 = pneg %p68
        $region54: #{tpu_custom_call.1} parent=47 // pred_check_branch
          %305 = sbr.rel (%p303) target = $region56
        $region55: #{tpu_custom_call.1} parent=47 // pred_region
          %306 = dma.done [#allocation6], 1024
        $region56: #{tpu_custom_call.1} parent=47 // pred_fallthru
          _
        // Predicated region
        $region57: #{tpu_custom_call.1} parent=47 // pred_check
          %p307 = pneg %p110
        $region58: #{tpu_custom_call.1} parent=47 // pred_check_branch
          %309 = sbr.rel (%p307) target = $region60
        $region59: #{tpu_custom_call.1} parent=47 // pred_region
          %310 = dma.done [#allocation6], 6144
        $region60: #{tpu_custom_call.1} parent=47 // pred_fallthru
          _
        // Predicated region
        $region61: #{tpu_custom_call.1} parent=47 // pred_check
          %p311 = pneg %p152
        $region62: #{tpu_custom_call.1} parent=47 // pred_check_branch
          %313 = sbr.rel (%p311) target = $region64
        $region63: #{tpu_custom_call.1} parent=47 // pred_region
          %314 = dma.done [#allocation9], 1024
        $region64: #{tpu_custom_call.1} parent=47 // pred_fallthru
          _
        %s315 = sand.u32 %s34, 1
        %s316 = scalar_lea.sflag [#allocation3], %s315
        %s317 = sand.u32 %s34, 1
        %s318 = smul.addr %s317, 8
        %s319 = scalar_lea.vmem [#allocation2], %s318
        %p320 = pneg %p47
        %p321 = pneg %p44
        %p322 = pneg %p68
        %p323 = pneg %p65
        %p324 = pneg %p89
        %p325 = pneg %p86
        %p326 = pneg %p110
        %p327 = pneg %p107
        %p328 = pneg %p131
        %p329 = pneg %p128
        %p330 = pneg %p152
        %p331 = pneg %p149
        %p332 = pneg %p173
        %p333 = pneg %p170
        %p334 = pneg %p199
        %p335 = pneg %p196
        %s336 = sand.u32 %s186, 1
        %s337 = scalar_lea.sflag [#allocation4], %s336
        %s338 = sand.u32 %s186, 1
        %s339 = smul.addr %s338, 16
        %s340 = scalar_lea.vmem [#allocation10], %s339
        %s341 = smul.u32 2, %s26
        %s342 = smul.u32 2, %s26
        %v344 = vld [vmem:[%s298] sm:$0xf]
        %v345 = vld [vmem:[%s298 + $0x4] sm:$0xf]
        %v346 = vld [vmem:[#allocation5] sm:$0xf]
        %v347 = vld [vmem:[#allocation5 + $0x4] sm:$0xf]
        %v348 = vld [vmem:[#allocation5 + $0x8] sm:$0xf]
        %v349 = vld [vmem:[#allocation5 + $0xc] sm:$0xf]
        %v350 = vld [vmem:[#allocation5 + $0x10] sm:$0xf]
        %v351 = vld [vmem:[#allocation5 + $0x14] sm:$0xf]
        %v352 = vld [vmem:[#allocation5 + $0x18] sm:$0xf]
        %v353 = vld [vmem:[#allocation5 + $0x1c] sm:$0xf]
        %v354 = vld [vmem:[#allocation5 + $0x20] sm:$0xf]
        %v355 = vld [vmem:[#allocation5 + $0x24] sm:$0xf]
        %v356 = vld [vmem:[#allocation5 + $0x28] sm:$0xf]
        %v357 = vld [vmem:[#allocation5 + $0x2c] sm:$0xf]
        %v358 = vld [vmem:[#allocation5 + $0x30] sm:$0xf]
        %v359 = vld [vmem:[#allocation5 + $0x34] sm:$0xf]
        %v360 = vld [vmem:[#allocation5 + $0x38] sm:$0xf]
        %v361 = vld [vmem:[#allocation5 + $0x3c] sm:$0xf]
        %v362 = vld [vmem:[%s2] sm:$0x1]
        %v364 = vlaneseq
        %v365 = vshrl.u32 %v364, 7
        %v366 = vsub.s32 0, %v365
        %v367 = vrot.slane %v362, %v366
        %v371 = vunpack.c.l.b16 %v344
        %v372 = vunpack.c.l.b16 %v345
        %v373 = vpack.c.b16 %v372, %v371
        %v391 = vunpack.c.l.b16 %v346
        %v392 = vunpack.c.l.b16 %v347
        %v393 = vunpack.c.l.b16 %v348
        %v394 = vunpack.c.l.b16 %v349
        %v395 = vunpack.c.l.b16 %v350
        %v396 = vunpack.c.l.b16 %v351
        %v397 = vunpack.c.l.b16 %v352
        %v398 = vunpack.c.l.b16 %v353
        %v399 = vunpack.c.l.b16 %v354
        %v400 = vunpack.c.l.b16 %v355
        %v401 = vunpack.c.l.b16 %v356
        %v402 = vunpack.c.l.b16 %v357
        %v403 = vunpack.c.l.b16 %v358
        %v404 = vunpack.c.l.b16 %v359
        %v405 = vunpack.c.l.b16 %v360
        %v406 = vunpack.c.l.b16 %v361
        %v407 = vpack.c.b16 %v392, %v391
        %v408 = vpack.c.b16 %v394, %v393
        %v409 = vpack.c.b16 %v396, %v395
        %v410 = vpack.c.b16 %v398, %v397
        %v411 = vpack.c.b16 %v400, %v399
        %v412 = vpack.c.b16 %v402, %v401
        %v413 = vpack.c.b16 %v404, %v403
        %v414 = vpack.c.b16 %v406, %v405
        %423 = vmatprep.subr.bf16.mxu0 0
        %424 = vmatpush1.bf16.msra.mxu0 %v407
        %425 = vmatprep.subr.bf16.mxu0 0
        %426 = vmatpush1.bf16.msra.mxu0 %v408
        %427 = vmatprep.subr.bf16.mxu0 0
        %428 = vmatpush1.bf16.msra.mxu0 %v409
        %429 = vmatprep.subr.bf16.mxu0 0
        %430 = vmatpush1.bf16.msra.mxu0 %v410
        %431 = vmatprep.subr.bf16.mxu0 0
        %432 = vmatpush1.bf16.msra.mxu0 %v411
        %433 = vmatprep.subr.bf16.mxu0 0
        %434 = vmatpush1.bf16.msra.mxu0 %v412
        %435 = vmatprep.subr.bf16.mxu0 0
        %436 = vmatpush1.bf16.msra.mxu0 %v413
        %437 = vmatprep.subr.bf16.mxu0 0
        %438 = vmatpush1.bf16.msra.mxu0 %v414
        %439 = vmatprep.subr.bf16.mxu0 0
        %440 = vmatpush1.bf16.msra.mxu0 0
        %441 = vmatprep.subr.bf16.mxu0 0
        %442 = vmatpush1.bf16.msra.mxu0 0
        %443 = vmatprep.subr.bf16.mxu0 0
        %444 = vmatpush1.bf16.msra.mxu0 0
        %445 = vmatprep.subr.bf16.mxu0 0
        %446 = vmatpush1.bf16.msra.mxu0 0
        %447 = vmatprep.subr.bf16.mxu0 0
        %448 = vmatpush1.bf16.msra.mxu0 0
        %449 = vmatprep.subr.bf16.mxu0 0
        %450 = vmatpush1.bf16.msra.mxu0 0
        %451 = vmatprep.subr.bf16.mxu0 0
        %452 = vmatpush1.bf16.msra.mxu0 0
        %453 = vmatprep.subr.bf16.mxu0 0
        %454 = vmatpush1.bf16.msra.mxu0 0
        %455 = vmatprep.mubr.bf16.mxu0 0
        %456 = vmatmul.mubr.bf16.gmra.mrb[0].mxu0 %v373
        %v457 = vpop.f32.mrb[0].mxu0
        %v458 = vadd.f32 %v367, %v457
        %v459 = vpop.f32.mrb[0].mxu0
        %v460 = vpop.f32.mrb[0].mxu0
        %v461 = vadd.f32 %v367, %v460
        %v462 = vpop.f32.mrb[0].mxu0
        %463 = vdwg.mxu0
        %v464 = vmax.f32 %v458, 0.0
        %v465 = vmax.f32 %v461, 0.0
        %v466 = vld [vmem:[#allocation7] sm:$0xf]
        %v467 = vld [vmem:[#allocation7 + $0x4] sm:$0xf]
        %v468 = vld [vmem:[#allocation7 + $0x8] sm:$0xf]
        %v469 = vld [vmem:[#allocation7 + $0xc] sm:$0xf]
        %v470 = vld [vmem:[#allocation7 + $0x10] sm:$0xf]
        %v471 = vld [vmem:[#allocation7 + $0x14] sm:$0xf]
        %v472 = vld [vmem:[#allocation7 + $0x18] sm:$0xf]
        %v473 = vld [vmem:[#allocation7 + $0x1c] sm:$0xf]
        %v474 = vld [vmem:[#allocation7 + $0x20] sm:$0xf]
        %v475 = vld [vmem:[#allocation7 + $0x24] sm:$0xf]
        %v476 = vld [vmem:[#allocation7 + $0x28] sm:$0xf]
        %v477 = vld [vmem:[#allocation7 + $0x2c] sm:$0xf]
        %v478 = vld [vmem:[#allocation7 + $0x30] sm:$0xf]
        %v479 = vld [vmem:[#allocation7 + $0x34] sm:$0xf]
        %v480 = vld [vmem:[#allocation7 + $0x38] sm:$0xf]
        %v481 = vld [vmem:[#allocation7 + $0x3c] sm:$0xf]
        %v482 = vld [vmem:[%s4] sm:$0x1]
        %v483 = vpack.c.bf16 %v465, %v464
        %v485 = vlaneseq
        %v486 = vshrl.u32 %v485, 7
        %v487 = vsub.s32 0, %v486
        %v488 = vrot.slane %v482, %v487
        %v506 = vunpack.c.l.b16 %v466
        %v507 = vunpack.c.l.b16 %v467
        %v508 = vunpack.c.l.b16 %v468
        %v509 = vunpack.c.l.b16 %v469
        %v510 = vunpack.c.l.b16 %v470
        %v511 = vunpack.c.l.b16 %v471
        %v512 = vunpack.c.l.b16 %v472
        %v513 = vunpack.c.l.b16 %v473
        %v514 = vunpack.c.l.b16 %v474
        %v515 = vunpack.c.l.b16 %v475
        %v516 = vunpack.c.l.b16 %v476
        %v517 = vunpack.c.l.b16 %v477
        %v518 = vunpack.c.l.b16 %v478
        %v519 = vunpack.c.l.b16 %v479
        %v520 = vunpack.c.l.b16 %v480
        %v521 = vunpack.c.l.b16 %v481
        %v522 = vpack.c.b16 %v507, %v506
        %v523 = vpack.c.b16 %v509, %v508
        %v524 = vpack.c.b16 %v511, %v510
        %v525 = vpack.c.b16 %v513, %v512
        %v526 = vpack.c.b16 %v515, %v514
        %v527 = vpack.c.b16 %v517, %v516
        %v528 = vpack.c.b16 %v519, %v518
        %v529 = vpack.c.b16 %v521, %v520
        %538 = vmatprep.subr.bf16.mxu0 0
        %539 = vmatpush1.bf16.msra.mxu0 %v522
        %540 = vmatprep.subr.bf16.mxu0 0
        %541 = vmatpush1.bf16.msra.mxu0 %v523
        %542 = vmatprep.subr.bf16.mxu0 0
        %543 = vmatpush1.bf16.msra.mxu0 %v524
        %544 = vmatprep.subr.bf16.mxu0 0
        %545 = vmatpush1.bf16.msra.mxu0 %v525
        %546 = vmatprep.subr.bf16.mxu0 0
        %547 = vmatpush1.bf16.msra.mxu0 %v526
        %548 = vmatprep.subr.bf16.mxu0 0
        %549 = vmatpush1.bf16.msra.mxu0 %v527
        %550 = vmatprep.subr.bf16.mxu0 0
        %551 = vmatpush1.bf16.msra.mxu0 %v528
        %552 = vmatprep.subr.bf16.mxu0 0
        %553 = vmatpush1.bf16.msra.mxu0 %v529
        %554 = vmatprep.subr.bf16.mxu0 0
        %555 = vmatpush1.bf16.msra.mxu0 0
        %556 = vmatprep.subr.bf16.mxu0 0
        %557 = vmatpush1.bf16.msra.mxu0 0
        %558 = vmatprep.subr.bf16.mxu0 0
        %559 = vmatpush1.bf16.msra.mxu0 0
        %560 = vmatprep.subr.bf16.mxu0 0
        %561 = vmatpush1.bf16.msra.mxu0 0
        %562 = vmatprep.subr.bf16.mxu0 0
        %563 = vmatpush1.bf16.msra.mxu0 0
        %564 = vmatprep.subr.bf16.mxu0 0
        %565 = vmatpush1.bf16.msra.mxu0 0
        %566 = vmatprep.subr.bf16.mxu0 0
        %567 = vmatpush1.bf16.msra.mxu0 0
        %568 = vmatprep.subr.bf16.mxu0 0
        %569 = vmatpush1.bf16.msra.mxu0 0
        %570 = vmatprep.mubr.bf16.mxu0 0
        %571 = vmatmul.mubr.bf16.gmra.mrb[0].mxu0 %v483
        %v572 = vpop.f32.mrb[0].mxu0
        %v573 = vadd.f32 %v488, %v572
        %v574 = vpop.f32.mrb[0].mxu0
        %v575 = vpop.f32.mrb[0].mxu0
        %v576 = vadd.f32 %v488, %v575
        %v577 = vpop.f32.mrb[0].mxu0
        %578 = vdwg.mxu0
        %v579 = vmax.f32 %v573, 0.0
        %v580 = vmax.f32 %v576, 0.0
        %s581 = scalar_lea.vmem [#allocation7], 64
        %v582 = vld [vmem:[%s581] sm:$0xf]
        %v583 = vld [vmem:[%s581 + $0x4] sm:$0xf]
        %v584 = vld [vmem:[%s581 + $0x8] sm:$0xf]
        %v585 = vld [vmem:[%s581 + $0xc] sm:$0xf]
        %v586 = vld [vmem:[%s581 + $0x10] sm:$0xf]
        %v587 = vld [vmem:[%s581 + $0x14] sm:$0xf]
        %v588 = vld [vmem:[%s581 + $0x18] sm:$0xf]
        %v589 = vld [vmem:[%s581 + $0x1c] sm:$0xf]
        %v590 = vld [vmem:[%s581 + $0x20] sm:$0xf]
        %v591 = vld [vmem:[%s581 + $0x24] sm:$0xf]
        %v592 = vld [vmem:[%s581 + $0x28] sm:$0xf]
        %v593 = vld [vmem:[%s581 + $0x2c] sm:$0xf]
        %v594 = vld [vmem:[%s581 + $0x30] sm:$0xf]
        %v595 = vld [vmem:[%s581 + $0x34] sm:$0xf]
        %v596 = vld [vmem:[%s581 + $0x38] sm:$0xf]
        %v597 = vld [vmem:[%s581 + $0x3c] sm:$0xf]
        %s598 = scalar_lea.vmem %s4, 1
        %v599 = vld [vmem:[%s598] sm:$0x1]
        %v600 = vpack.c.bf16 %v580, %v579
        %v602 = vlaneseq
        %v603 = vshrl.u32 %v602, 7
        %v604 = vsub.s32 0, %v603
        %v605 = vrot.slane %v599, %v604
        %v623 = vunpack.c.l.b16 %v582
        %v624 = vunpack.c.l.b16 %v583
        %v625 = vunpack.c.l.b16 %v584
        %v626 = vunpack.c.l.b16 %v585
        %v627 = vunpack.c.l.b16 %v586
        %v628 = vunpack.c.l.b16 %v587
        %v629 = vunpack.c.l.b16 %v588
        %v630 = vunpack.c.l.b16 %v589
        %v631 = vunpack.c.l.b16 %v590
        %v632 = vunpack.c.l.b16 %v591
        %v633 = vunpack.c.l.b16 %v592
        %v634 = vunpack.c.l.b16 %v593
        %v635 = vunpack.c.l.b16 %v594
        %v636 = vunpack.c.l.b16 %v595
        %v637 = vunpack.c.l.b16 %v596
        %v638 = vunpack.c.l.b16 %v597
        %v639 = vpack.c.b16 %v624, %v623
        %v640 = vpack.c.b16 %v626, %v625
        %v641 = vpack.c.b16 %v628, %v627
        %v642 = vpack.c.b16 %v630, %v629
        %v643 = vpack.c.b16 %v632, %v631
        %v644 = vpack.c.b16 %v634, %v633
        %v645 = vpack.c.b16 %v636, %v635
        %v646 = vpack.c.b16 %v638, %v637
        %655 = vmatprep.subr.bf16.mxu0 0
        %656 = vmatpush1.bf16.msra.mxu0 %v639
        %657 = vmatprep.subr.bf16.mxu0 0
        %658 = vmatpush1.bf16.msra.mxu0 %v640
        %659 = vmatprep.subr.bf16.mxu0 0
        %660 = vmatpush1.bf16.msra.mxu0 %v641
        %661 = vmatprep.subr.bf16.mxu0 0
        %662 = vmatpush1.bf16.msra.mxu0 %v642
        %663 = vmatprep.subr.bf16.mxu0 0
        %664 = vmatpush1.bf16.msra.mxu0 %v643
        %665 = vmatprep.subr.bf16.mxu0 0
        %666 = vmatpush1.bf16.msra.mxu0 %v644
        %667 = vmatprep.subr.bf16.mxu0 0
        %668 = vmatpush1.bf16.msra.mxu0 %v645
        %669 = vmatprep.subr.bf16.mxu0 0
        %670 = vmatpush1.bf16.msra.mxu0 %v646
        %671 = vmatprep.subr.bf16.mxu0 0
        %672 = vmatpush1.bf16.msra.mxu0 0
        %673 = vmatprep.subr.bf16.mxu0 0
        %674 = vmatpush1.bf16.msra.mxu0 0
        %675 = vmatprep.subr.bf16.mxu0 0
        %676 = vmatpush1.bf16.msra.mxu0 0
        %677 = vmatprep.subr.bf16.mxu0 0
        %678 = vmatpush1.bf16.msra.mxu0 0
        %679 = vmatprep.subr.bf16.mxu0 0
        %680 = vmatpush1.bf16.msra.mxu0 0
        %681 = vmatprep.subr.bf16.mxu0 0
        %682 = vmatpush1.bf16.msra.mxu0 0
        %683 = vmatprep.subr.bf16.mxu0 0
        %684 = vmatpush1.bf16.msra.mxu0 0
        %685 = vmatprep.subr.bf16.mxu0 0
        %686 = vmatpush1.bf16.msra.mxu0 0
        %687 = vmatprep.mubr.bf16.mxu0 0
        %688 = vmatmul.mubr.bf16.gmra.mrb[0].mxu0 %v600
        %v689 = vpop.f32.mrb[0].mxu0
        %v690 = vadd.f32 %v605, %v689
        %v691 = vpop.f32.mrb[0].mxu0
        %v692 = vpop.f32.mrb[0].mxu0
        %v693 = vadd.f32 %v605, %v692
        %v694 = vpop.f32.mrb[0].mxu0
        %695 = vdwg.mxu0
        %v696 = vmax.f32 %v690, 0.0
        %v697 = vmax.f32 %v693, 0.0
        %s698 = scalar_lea.vmem [#allocation7], 128
        %v699 = vld [vmem:[%s698] sm:$0xf]
        %v700 = vld [vmem:[%s698 + $0x4] sm:$0xf]
        %v701 = vld [vmem:[%s698 + $0x8] sm:$0xf]
        %v702 = vld [vmem:[%s698 + $0xc] sm:$0xf]
        %v703 = vld [vmem:[%s698 + $0x10] sm:$0xf]
        %v704 = vld [vmem:[%s698 + $0x14] sm:$0xf]
        %v705 = vld [vmem:[%s698 + $0x18] sm:$0xf]
        %v706 = vld [vmem:[%s698 + $0x1c] sm:$0xf]
        %v707 = vld [vmem:[%s698 + $0x20] sm:$0xf]
        %v708 = vld [vmem:[%s698 + $0x24] sm:$0xf]
        %v709 = vld [vmem:[%s698 + $0x28] sm:$0xf]
        %v710 = vld [vmem:[%s698 + $0x2c] sm:$0xf]
        %v711 = vld [vmem:[%s698 + $0x30] sm:$0xf]
        %v712 = vld [vmem:[%s698 + $0x34] sm:$0xf]
        %v713 = vld [vmem:[%s698 + $0x38] sm:$0xf]
        %v714 = vld [vmem:[%s698 + $0x3c] sm:$0xf]
        %s715 = scalar_lea.vmem %s4, 2
        %v716 = vld [vmem:[%s715] sm:$0x1]
        %v717 = vpack.c.bf16 %v697, %v696
        %v719 = vlaneseq
        %v720 = vshrl.u32 %v719, 7
        %v721 = vsub.s32 0, %v720
        %v722 = vrot.slane %v716, %v721
        %v740 = vunpack.c.l.b16 %v699
        %v741 = vunpack.c.l.b16 %v700
        %v742 = vunpack.c.l.b16 %v701
        %v743 = vunpack.c.l.b16 %v702
        %v744 = vunpack.c.l.b16 %v703
        %v745 = vunpack.c.l.b16 %v704
        %v746 = vunpack.c.l.b16 %v705
        %v747 = vunpack.c.l.b16 %v706
        %v748 = vunpack.c.l.b16 %v707
        %v749 = vunpack.c.l.b16 %v708
        %v750 = vunpack.c.l.b16 %v709
        %v751 = vunpack.c.l.b16 %v710
        %v752 = vunpack.c.l.b16 %v711
        %v753 = vunpack.c.l.b16 %v712
        %v754 = vunpack.c.l.b16 %v713
        %v755 = vunpack.c.l.b16 %v714
        %v756 = vpack.c.b16 %v741, %v740
        %v757 = vpack.c.b16 %v743, %v742
        %v758 = vpack.c.b16 %v745, %v744
        %v759 = vpack.c.b16 %v747, %v746
        %v760 = vpack.c.b16 %v749, %v748
        %v761 = vpack.c.b16 %v751, %v750
        %v762 = vpack.c.b16 %v753, %v752
        %v763 = vpack.c.b16 %v755, %v754
        %772 = vmatprep.subr.bf16.mxu0 0
        %773 = vmatpush1.bf16.msra.mxu0 %v756
        %774 = vmatprep.subr.bf16.mxu0 0
        %775 = vmatpush1.bf16.msra.mxu0 %v757
        %776 = vmatprep.subr.bf16.mxu0 0
        %777 = vmatpush1.bf16.msra.mxu0 %v758
        %778 = vmatprep.subr.bf16.mxu0 0
        %779 = vmatpush1.bf16.msra.mxu0 %v759
        %780 = vmatprep.subr.bf16.mxu0 0
        %781 = vmatpush1.bf16.msra.mxu0 %v760
        %782 = vmatprep.subr.bf16.mxu0 0
        %783 = vmatpush1.bf16.msra.mxu0 %v761
        %784 = vmatprep.subr.bf16.mxu0 0
        %785 = vmatpush1.bf16.msra.mxu0 %v762
        %786 = vmatprep.subr.bf16.mxu0 0
        %787 = vmatpush1.bf16.msra.mxu0 %v763
        %788 = vmatprep.subr.bf16.mxu0 0
        %789 = vmatpush1.bf16.msra.mxu0 0
        %790 = vmatprep.subr.bf16.mxu0 0
        %791 = vmatpush1.bf16.msra.mxu0 0
        %792 = vmatprep.subr.bf16.mxu0 0
        %793 = vmatpush1.bf16.msra.mxu0 0
        %794 = vmatprep.subr.bf16.mxu0 0
        %795 = vmatpush1.bf16.msra.mxu0 0
        %796 = vmatprep.subr.bf16.mxu0 0
        %797 = vmatpush1.bf16.msra.mxu0 0
        %798 = vmatprep.subr.bf16.mxu0 0
        %799 = vmatpush1.bf16.msra.mxu0 0
        %800 = vmatprep.subr.bf16.mxu0 0
        %801 = vmatpush1.bf16.msra.mxu0 0
        %802 = vmatprep.subr.bf16.mxu0 0
        %803 = vmatpush1.bf16.msra.mxu0 0
        %804 = vmatprep.mubr.bf16.mxu0 0
        %805 = vmatmul.mubr.bf16.gmra.mrb[0].mxu0 %v717
        %v806 = vpop.f32.mrb[0].mxu0
        %v807 = vadd.f32 %v722, %v806
        %v808 = vpop.f32.mrb[0].mxu0
        %v809 = vpop.f32.mrb[0].mxu0
        %v810 = vadd.f32 %v722, %v809
        %v811 = vpop.f32.mrb[0].mxu0
        %812 = vdwg.mxu0
        %v813 = vmax.f32 %v807, 0.0
        %v814 = vmax.f32 %v810, 0.0
        %s815 = scalar_lea.vmem [#allocation7], 192
        %v816 = vld [vmem:[%s815] sm:$0xf]
        %v817 = vld [vmem:[%s815 + $0x4] sm:$0xf]
        %v818 = vld [vmem:[%s815 + $0x8] sm:$0xf]
        %v819 = vld [vmem:[%s815 + $0xc] sm:$0xf]
        %v820 = vld [vmem:[%s815 + $0x10] sm:$0xf]
        %v821 = vld [vmem:[%s815 + $0x14] sm:$0xf]
        %v822 = vld [vmem:[%s815 + $0x18] sm:$0xf]
        %v823 = vld [vmem:[%s815 + $0x1c] sm:$0xf]
        %v824 = vld [vmem:[%s815 + $0x20] sm:$0xf]
        %v825 = vld [vmem:[%s815 + $0x24] sm:$0xf]
        %v826 = vld [vmem:[%s815 + $0x28] sm:$0xf]
        %v827 = vld [vmem:[%s815 + $0x2c] sm:$0xf]
        %v828 = vld [vmem:[%s815 + $0x30] sm:$0xf]
        %v829 = vld [vmem:[%s815 + $0x34] sm:$0xf]
        %v830 = vld [vmem:[%s815 + $0x38] sm:$0xf]
        %v831 = vld [vmem:[%s815 + $0x3c] sm:$0xf]
        %s832 = scalar_lea.vmem %s4, 3
        %v833 = vld [vmem:[%s832] sm:$0x1]
        %v834 = vpack.c.bf16 %v814, %v813
        %v836 = vlaneseq
        %v837 = vshrl.u32 %v836, 7
        %v838 = vsub.s32 0, %v837
        %v839 = vrot.slane %v833, %v838
        %v857 = vunpack.c.l.b16 %v816
        %v858 = vunpack.c.l.b16 %v817
        %v859 = vunpack.c.l.b16 %v818
        %v860 = vunpack.c.l.b16 %v819
        %v861 = vunpack.c.l.b16 %v820
        %v862 = vunpack.c.l.b16 %v821
        %v863 = vunpack.c.l.b16 %v822
        %v864 = vunpack.c.l.b16 %v823
        %v865 = vunpack.c.l.b16 %v824
        %v866 = vunpack.c.l.b16 %v825
        %v867 = vunpack.c.l.b16 %v826
        %v868 = vunpack.c.l.b16 %v827
        %v869 = vunpack.c.l.b16 %v828
        %v870 = vunpack.c.l.b16 %v829
        %v871 = vunpack.c.l.b16 %v830
        %v872 = vunpack.c.l.b16 %v831
        %v873 = vpack.c.b16 %v858, %v857
        %v874 = vpack.c.b16 %v860, %v859
        %v875 = vpack.c.b16 %v862, %v861
        %v876 = vpack.c.b16 %v864, %v863
        %v877 = vpack.c.b16 %v866, %v865
        %v878 = vpack.c.b16 %v868, %v867
        %v879 = vpack.c.b16 %v870, %v869
        %v880 = vpack.c.b16 %v872, %v871
        %889 = vmatprep.subr.bf16.mxu0 0
        %890 = vmatpush1.bf16.msra.mxu0 %v873
        %891 = vmatprep.subr.bf16.mxu0 0
        %892 = vmatpush1.bf16.msra.mxu0 %v874
        %893 = vmatprep.subr.bf16.mxu0 0
        %894 = vmatpush1.bf16.msra.mxu0 %v875
        %895 = vmatprep.subr.bf16.mxu0 0
        %896 = vmatpush1.bf16.msra.mxu0 %v876
        %897 = vmatprep.subr.bf16.mxu0 0
        %898 = vmatpush1.bf16.msra.mxu0 %v877
        %899 = vmatprep.subr.bf16.mxu0 0
        %900 = vmatpush1.bf16.msra.mxu0 %v878
        %901 = vmatprep.subr.bf16.mxu0 0
        %902 = vmatpush1.bf16.msra.mxu0 %v879
        %903 = vmatprep.subr.bf16.mxu0 0
        %904 = vmatpush1.bf16.msra.mxu0 %v880
        %905 = vmatprep.subr.bf16.mxu0 0
        %906 = vmatpush1.bf16.msra.mxu0 0
        %907 = vmatprep.subr.bf16.mxu0 0
        %908 = vmatpush1.bf16.msra.mxu0 0
        %909 = vmatprep.subr.bf16.mxu0 0
        %910 = vmatpush1.bf16.msra.mxu0 0
        %911 = vmatprep.subr.bf16.mxu0 0
        %912 = vmatpush1.bf16.msra.mxu0 0
        %913 = vmatprep.subr.bf16.mxu0 0
        %914 = vmatpush1.bf16.msra.mxu0 0
        %915 = vmatprep.subr.bf16.mxu0 0
        %916 = vmatpush1.bf16.msra.mxu0 0
        %917 = vmatprep.subr.bf16.mxu0 0
        %918 = vmatpush1.bf16.msra.mxu0 0
        %919 = vmatprep.subr.bf16.mxu0 0
        %920 = vmatpush1.bf16.msra.mxu0 0
        %921 = vmatprep.mubr.bf16.mxu0 0
        %922 = vmatmul.mubr.bf16.gmra.mrb[0].mxu0 %v834
        %v923 = vpop.f32.mrb[0].mxu0
        %v924 = vadd.f32 %v839, %v923
        %v925 = vpop.f32.mrb[0].mxu0
        %v926 = vpop.f32.mrb[0].mxu0
        %v927 = vadd.f32 %v839, %v926
        %v928 = vpop.f32.mrb[0].mxu0
        %929 = vdwg.mxu0
        %v930 = vmax.f32 %v924, 0.0
        %v931 = vmax.f32 %v927, 0.0
        %s932 = scalar_lea.vmem [#allocation7], 256
        %v933 = vld [vmem:[%s932] sm:$0xf]
        %v934 = vld [vmem:[%s932 + $0x4] sm:$0xf]
        %v935 = vld [vmem:[%s932 + $0x8] sm:$0xf]
        %v936 = vld [vmem:[%s932 + $0xc] sm:$0xf]
        %v937 = vld [vmem:[%s932 + $0x10] sm:$0xf]
        %v938 = vld [vmem:[%s932 + $0x14] sm:$0xf]
        %v939 = vld [vmem:[%s932 + $0x18] sm:$0xf]
        %v940 = vld [vmem:[%s932 + $0x1c] sm:$0xf]
        %v941 = vld [vmem:[%s932 + $0x20] sm:$0xf]
        %v942 = vld [vmem:[%s932 + $0x24] sm:$0xf]
        %v943 = vld [vmem:[%s932 + $0x28] sm:$0xf]
        %v944 = vld [vmem:[%s932 + $0x2c] sm:$0xf]
        %v945 = vld [vmem:[%s932 + $0x30] sm:$0xf]
        %v946 = vld [vmem:[%s932 + $0x34] sm:$0xf]
        %v947 = vld [vmem:[%s932 + $0x38] sm:$0xf]
        %v948 = vld [vmem:[%s932 + $0x3c] sm:$0xf]
        %s949 = scalar_lea.vmem %s4, 4
        %v950 = vld [vmem:[%s949] sm:$0x1]
        %v951 = vpack.c.bf16 %v931, %v930
        %v953 = vlaneseq
        %v954 = vshrl.u32 %v953, 7
        %v955 = vsub.s32 0, %v954
        %v956 = vrot.slane %v950, %v955
        %v974 = vunpack.c.l.b16 %v933
        %v975 = vunpack.c.l.b16 %v934
        %v976 = vunpack.c.l.b16 %v935
        %v977 = vunpack.c.l.b16 %v936
        %v978 = vunpack.c.l.b16 %v937
        %v979 = vunpack.c.l.b16 %v938
        %v980 = vunpack.c.l.b16 %v939
        %v981 = vunpack.c.l.b16 %v940
        %v982 = vunpack.c.l.b16 %v941
        %v983 = vunpack.c.l.b16 %v942
        %v984 = vunpack.c.l.b16 %v943
        %v985 = vunpack.c.l.b16 %v944
        %v986 = vunpack.c.l.b16 %v945
        %v987 = vunpack.c.l.b16 %v946
        %v988 = vunpack.c.l.b16 %v947
        %v989 = vunpack.c.l.b16 %v948
        %v990 = vpack.c.b16 %v975, %v974
        %v991 = vpack.c.b16 %v977, %v976
        %v992 = vpack.c.b16 %v979, %v978
        %v993 = vpack.c.b16 %v981, %v980
        %v994 = vpack.c.b16 %v983, %v982
        %v995 = vpack.c.b16 %v985, %v984
        %v996 = vpack.c.b16 %v987, %v986
        %v997 = vpack.c.b16 %v989, %v988
        %1006 = vmatprep.subr.bf16.mxu0 0
        %1007 = vmatpush1.bf16.msra.mxu0 %v990
        %1008 = vmatprep.subr.bf16.mxu0 0
        %1009 = vmatpush1.bf16.msra.mxu0 %v991
        %1010 = vmatprep.subr.bf16.mxu0 0
        %1011 = vmatpush1.bf16.msra.mxu0 %v992
        %1012 = vmatprep.subr.bf16.mxu0 0
        %1013 = vmatpush1.bf16.msra.mxu0 %v993
        %1014 = vmatprep.subr.bf16.mxu0 0
        %1015 = vmatpush1.bf16.msra.mxu0 %v994
        %1016 = vmatprep.subr.bf16.mxu0 0
        %1017 = vmatpush1.bf16.msra.mxu0 %v995
        %1018 = vmatprep.subr.bf16.mxu0 0
        %1019 = vmatpush1.bf16.msra.mxu0 %v996
        %1020 = vmatprep.subr.bf16.mxu0 0
        %1021 = vmatpush1.bf16.msra.mxu0 %v997
        %1022 = vmatprep.subr.bf16.mxu0 0
        %1023 = vmatpush1.bf16.msra.mxu0 0
        %1024 = vmatprep.subr.bf16.mxu0 0
        %1025 = vmatpush1.bf16.msra.mxu0 0
        %1026 = vmatprep.subr.bf16.mxu0 0
        %1027 = vmatpush1.bf16.msra.mxu0 0
        %1028 = vmatprep.subr.bf16.mxu0 0
        %1029 = vmatpush1.bf16.msra.mxu0 0
        %1030 = vmatprep.subr.bf16.mxu0 0
        %1031 = vmatpush1.bf16.msra.mxu0 0
        %1032 = vmatprep.subr.bf16.mxu0 0
        %1033 = vmatpush1.bf16.msra.mxu0 0
        %1034 = vmatprep.subr.bf16.mxu0 0
        %1035 = vmatpush1.bf16.msra.mxu0 0
        %1036 = vmatprep.subr.bf16.mxu0 0
        %1037 = vmatpush1.bf16.msra.mxu0 0
        %1038 = vmatprep.mubr.bf16.mxu0 0
        %1039 = vmatmul.mubr.bf16.gmra.mrb[0].mxu0 %v951
        %v1040 = vpop.f32.mrb[0].mxu0
        %v1041 = vadd.f32 %v956, %v1040
        %v1042 = vpop.f32.mrb[0].mxu0
        %v1043 = vpop.f32.mrb[0].mxu0
        %v1044 = vadd.f32 %v956, %v1043
        %v1045 = vpop.f32.mrb[0].mxu0
        %1046 = vdwg.mxu0
        %v1047 = vmax.f32 %v1041, 0.0
        %v1048 = vmax.f32 %v1044, 0.0
        %s1049 = scalar_lea.vmem [#allocation7], 320
        %v1050 = vld [vmem:[%s1049] sm:$0xf]
        %v1051 = vld [vmem:[%s1049 + $0x4] sm:$0xf]
        %v1052 = vld [vmem:[%s1049 + $0x8] sm:$0xf]
        %v1053 = vld [vmem:[%s1049 + $0xc] sm:$0xf]
        %v1054 = vld [vmem:[%s1049 + $0x10] sm:$0xf]
        %v1055 = vld [vmem:[%s1049 + $0x14] sm:$0xf]
        %v1056 = vld [vmem:[%s1049 + $0x18] sm:$0xf]
        %v1057 = vld [vmem:[%s1049 + $0x1c] sm:$0xf]
        %v1058 = vld [vmem:[%s1049 + $0x20] sm:$0xf]
        %v1059 = vld [vmem:[%s1049 + $0x24] sm:$0xf]
        %v1060 = vld [vmem:[%s1049 + $0x28] sm:$0xf]
        %v1061 = vld [vmem:[%s1049 + $0x2c] sm:$0xf]
        %v1062 = vld [vmem:[%s1049 + $0x30] sm:$0xf]
        %v1063 = vld [vmem:[%s1049 + $0x34] sm:$0xf]
        %v1064 = vld [vmem:[%s1049 + $0x38] sm:$0xf]
        %v1065 = vld [vmem:[%s1049 + $0x3c] sm:$0xf]
        %s1066 = scalar_lea.vmem %s4, 5
        %v1067 = vld [vmem:[%s1066] sm:$0x1]
        %v1068 = vpack.c.bf16 %v1048, %v1047
        %v1070 = vlaneseq
        %v1071 = vshrl.u32 %v1070, 7
        %v1072 = vsub.s32 0, %v1071
        %v1073 = vrot.slane %v1067, %v1072
        %v1091 = vunpack.c.l.b16 %v1050
        %v1092 = vunpack.c.l.b16 %v1051
        %v1093 = vunpack.c.l.b16 %v1052
        %v1094 = vunpack.c.l.b16 %v1053
        %v1095 = vunpack.c.l.b16 %v1054
        %v1096 = vunpack.c.l.b16 %v1055
        %v1097 = vunpack.c.l.b16 %v1056
        %v1098 = vunpack.c.l.b16 %v1057
        %v1099 = vunpack.c.l.b16 %v1058
        %v1100 = vunpack.c.l.b16 %v1059
        %v1101 = vunpack.c.l.b16 %v1060
        %v1102 = vunpack.c.l.b16 %v1061
        %v1103 = vunpack.c.l.b16 %v1062
        %v1104 = vunpack.c.l.b16 %v1063
        %v1105 = vunpack.c.l.b16 %v1064
        %v1106 = vunpack.c.l.b16 %v1065
        %v1107 = vpack.c.b16 %v1092, %v1091
        %v1108 = vpack.c.b16 %v1094, %v1093
        %v1109 = vpack.c.b16 %v1096, %v1095
        %v1110 = vpack.c.b16 %v1098, %v1097
        %v1111 = vpack.c.b16 %v1100, %v1099
        %v1112 = vpack.c.b16 %v1102, %v1101
        %v1113 = vpack.c.b16 %v1104, %v1103
        %v1114 = vpack.c.b16 %v1106, %v1105
        %1123 = vmatprep.subr.bf16.mxu0 0
        %1124 = vmatpush1.bf16.msra.mxu0 %v1107
        %1125 = vmatprep.subr.bf16.mxu0 0
        %1126 = vmatpush1.bf16.msra.mxu0 %v1108
        %1127 = vmatprep.subr.bf16.mxu0 0
        %1128 = vmatpush1.bf16.msra.mxu0 %v1109
        %1129 = vmatprep.subr.bf16.mxu0 0
        %1130 = vmatpush1.bf16.msra.mxu0 %v1110
        %1131 = vmatprep.subr.bf16.mxu0 0
        %1132 = vmatpush1.bf16.msra.mxu0 %v1111
        %1133 = vmatprep.subr.bf16.mxu0 0
        %1134 = vmatpush1.bf16.msra.mxu0 %v1112
        %1135 = vmatprep.subr.bf16.mxu0 0
        %1136 = vmatpush1.bf16.msra.mxu0 %v1113
        %1137 = vmatprep.subr.bf16.mxu0 0
        %1138 = vmatpush1.bf16.msra.mxu0 %v1114
        %1139 = vmatprep.subr.bf16.mxu0 0
        %1140 = vmatpush1.bf16.msra.mxu0 0
        %1141 = vmatprep.subr.bf16.mxu0 0
        %1142 = vmatpush1.bf16.msra.mxu0 0
        %1143 = vmatprep.subr.bf16.mxu0 0
        %1144 = vmatpush1.bf16.msra.mxu0 0
        %1145 = vmatprep.subr.bf16.mxu0 0
        %1146 = vmatpush1.bf16.msra.mxu0 0
        %1147 = vmatprep.subr.bf16.mxu0 0
        %1148 = vmatpush1.bf16.msra.mxu0 0
        %1149 = vmatprep.subr.bf16.mxu0 0
        %1150 = vmatpush1.bf16.msra.mxu0 0
        %1151 = vmatprep.subr.bf16.mxu0 0
        %1152 = vmatpush1.bf16.msra.mxu0 0
        %1153 = vmatprep.subr.bf16.mxu0 0
        %1154 = vmatpush1.bf16.msra.mxu0 0
        %1155 = vmatprep.mubr.bf16.mxu0 0
        %1156 = vmatmul.mubr.bf16.gmra.mrb[0].mxu0 %v1068
        %v1157 = vpop.f32.mrb[0].mxu0
        %v1158 = vadd.f32 %v1073, %v1157
        %v1159 = vpop.f32.mrb[0].mxu0
        %v1160 = vpop.f32.mrb[0].mxu0
        %v1161 = vadd.f32 %v1073, %v1160
        %v1162 = vpop.f32.mrb[0].mxu0
        %1163 = vdwg.mxu0
        %v1164 = vmax.f32 %v1158, 0.0
        %v1165 = vmax.f32 %v1161, 0.0
        %v1166 = vpack.c.bf16 %v1165, %v1164
        %v1167 = vld [vmem:[#allocation8] sm:$0xf]
        %v1168 = vld [vmem:[#allocation8 + $0x4] sm:$0xf]
        %v1169 = vld [vmem:[#allocation8 + $0x8] sm:$0xf]
        %v1170 = vld [vmem:[#allocation8 + $0xc] sm:$0xf]
        %v1171 = vld [vmem:[#allocation8 + $0x10] sm:$0xf]
        %v1172 = vld [vmem:[#allocation8 + $0x14] sm:$0xf]
        %v1173 = vld [vmem:[#allocation8 + $0x18] sm:$0xf]
        %v1174 = vld [vmem:[#allocation8 + $0x1c] sm:$0xf]
        %v1175 = vld [vmem:[#allocation8 + $0x20] sm:$0xf]
        %v1176 = vld [vmem:[#allocation8 + $0x24] sm:$0xf]
        %v1177 = vld [vmem:[#allocation8 + $0x28] sm:$0xf]
        %v1178 = vld [vmem:[#allocation8 + $0x2c] sm:$0xf]
        %v1179 = vld [vmem:[#allocation8 + $0x30] sm:$0xf]
        %v1180 = vld [vmem:[#allocation8 + $0x34] sm:$0xf]
        %v1181 = vld [vmem:[#allocation8 + $0x38] sm:$0xf]
        %v1182 = vld [vmem:[#allocation8 + $0x3c] sm:$0xf]
        %v1183 = vld [vmem:[%s6] sm:$0x1]
        %v1185 = vlaneseq
        %v1186 = vshrl.u32 %v1185, 7
        %v1187 = vsub.s32 0, %v1186
        %v1188 = vrot.slane %v1183, %v1187
        %v1206 = vunpack.c.l.b16 %v1167
        %v1207 = vunpack.c.l.b16 %v1168
        %v1208 = vunpack.c.l.b16 %v1169
        %v1209 = vunpack.c.l.b16 %v1170
        %v1210 = vunpack.c.l.b16 %v1171
        %v1211 = vunpack.c.l.b16 %v1172
        %v1212 = vunpack.c.l.b16 %v1173
        %v1213 = vunpack.c.l.b16 %v1174
        %v1214 = vunpack.c.l.b16 %v1175
        %v1215 = vunpack.c.l.b16 %v1176
        %v1216 = vunpack.c.l.b16 %v1177
        %v1217 = vunpack.c.l.b16 %v1178
        %v1218 = vunpack.c.l.b16 %v1179
        %v1219 = vunpack.c.l.b16 %v1180
        %v1220 = vunpack.c.l.b16 %v1181
        %v1221 = vunpack.c.l.b16 %v1182
        %v1222 = vpack.c.b16 %v1207, %v1206
        %v1223 = vpack.c.b16 %v1209, %v1208
        %v1224 = vpack.c.b16 %v1211, %v1210
        %v1225 = vpack.c.b16 %v1213, %v1212
        %v1226 = vpack.c.b16 %v1215, %v1214
        %v1227 = vpack.c.b16 %v1217, %v1216
        %v1228 = vpack.c.b16 %v1219, %v1218
        %v1229 = vpack.c.b16 %v1221, %v1220
        %1238 = vmatprep.subr.bf16.mxu0 0
        %1239 = vmatpush1.bf16.msra.mxu0 %v1222
        %1240 = vmatprep.subr.bf16.mxu0 0
        %1241 = vmatpush1.bf16.msra.mxu0 %v1223
        %1242 = vmatprep.subr.bf16.mxu0 0
        %1243 = vmatpush1.bf16.msra.mxu0 %v1224
        %1244 = vmatprep.subr.bf16.mxu0 0
        %1245 = vmatpush1.bf16.msra.mxu0 %v1225
        %1246 = vmatprep.subr.bf16.mxu0 0
        %1247 = vmatpush1.bf16.msra.mxu0 %v1226
        %1248 = vmatprep.subr.bf16.mxu0 0
        %1249 = vmatpush1.bf16.msra.mxu0 %v1227
        %1250 = vmatprep.subr.bf16.mxu0 0
        %1251 = vmatpush1.bf16.msra.mxu0 %v1228
        %1252 = vmatprep.subr.bf16.mxu0 0
        %1253 = vmatpush1.bf16.msra.mxu0 %v1229
        %1254 = vmatprep.subr.bf16.mxu0 0
        %1255 = vmatpush1.bf16.msra.mxu0 0
        %1256 = vmatprep.subr.bf16.mxu0 0
        %1257 = vmatpush1.bf16.msra.mxu0 0
        %1258 = vmatprep.subr.bf16.mxu0 0
        %1259 = vmatpush1.bf16.msra.mxu0 0
        %1260 = vmatprep.subr.bf16.mxu0 0
        %1261 = vmatpush1.bf16.msra.mxu0 0
        %1262 = vmatprep.subr.bf16.mxu0 0
        %1263 = vmatpush1.bf16.msra.mxu0 0
        %1264 = vmatprep.subr.bf16.mxu0 0
        %1265 = vmatpush1.bf16.msra.mxu0 0
        %1266 = vmatprep.subr.bf16.mxu0 0
        %1267 = vmatpush1.bf16.msra.mxu0 0
        %1268 = vmatprep.subr.bf16.mxu0 0
        %1269 = vmatpush1.bf16.msra.mxu0 0
        %1270 = vmatprep.mubr.bf16.mxu0 0
        %1271 = vmatmul.mubr.bf16.gmra.mrb[0].mxu0 %v1166
        %v1272 = vpop.f32.mrb[0].mxu0
        %v1273 = vadd.f32 %v1188, %v1272
        %v1274 = vpop.f32.mrb[0].mxu0
        %v1275 = vpop.f32.mrb[0].mxu0
        %v1276 = vadd.f32 %v1188, %v1275
        %v1277 = vpop.f32.mrb[0].mxu0
        %1278 = vdwg.mxu0
        %1279 = vst [vmem:[%s340] sm:$0xff] %v1273
        %1280 = vst [vmem:[%s340 + $0x8] sm:$0xff] %v1276
        %s1281 = sand.u32 %s186, 1
        %s1282 = scalar_lea.sflag [#allocation4], %s1281
        %s1283 = sand.u32 %s186, 1
        %s1284 = smul.addr %s1283, 16
        %s1285 = scalar_lea.vmem [#allocation10], %s1284
        // Predicated region
        $region65: #{tpu_custom_call.1} parent=47 // pred_check
          %p1286 = pneg %p196
        $region66: #{tpu_custom_call.1} parent=47 // pred_check_branch
          %1288 = sbr.rel (%p1286) target = $region68
        $region67: #{tpu_custom_call.1} parent=47 // pred_region
          %s1289 = smul.u32 2, %s26
          %s1291 = ssub.s32 256, 256
          %1292 = vsyncadd %s1282, %s1291
          %s1293 = smul.addr %s1289, 128
          %s1294 = scalar_lea.hbm %s7, %s1293
          %s1295 = sshll.u32 %s1285, 4
          %s1296 = int_to_ptr.vmem [resolvable:$true] %s1295
          %1301 = dma.vmem_to_hbm [thread:$0]  %s1296, 256, %s1294, %s1282, 128, 128, 8
        $region68: #{tpu_custom_call.1} parent=47 // pred_fallthru
          _
      $region48: #{tpu_custom_call.1} parent=5 // pred_fallthru
        _
      %p1302 = scmp.le.s32.totalorder 2, %s21
      // Predicated region
      $region69: #{tpu_custom_call.1} parent=5 // pred_check
        %p1303 = pneg %p1302
      $region70: #{tpu_custom_call.1} parent=5 // pred_check_branch
        %1305 = sbr.rel (%p1303) target = $region72
      $region71: #{tpu_custom_call.1} parent=5 // pred_region
        %s1306 = ssub.s32 %s21, 2
        // Predicated region
        $region73: #{tpu_custom_call.1} parent=71 // pred_check
          %p1307 = pneg %p202
        $region74: #{tpu_custom_call.1} parent=71 // pred_check_branch
          %1309 = sbr.rel (%p1307) target = $region76
        $region75: #{tpu_custom_call.1} parent=71 // pred_region
          %s1310 = sand.u32 %s187, 1
          %s1311 = scalar_lea.sflag [#allocation4], %s1310
          %s1312 = sand.u32 %s187, 1
          %s1313 = smul.addr %s1312, 16
          %s1314 = scalar_lea.vmem [#allocation10], %s1313
          %1315 = dma.done %s1311, 256
        $region76: #{tpu_custom_call.1} parent=71 // pred_fallthru
          _
      $region72: #{tpu_custom_call.1} parent=5 // pred_fallthru
        _
    $region6: #{tpu_custom_call.1} parent=1 // loop_footer
      %s25 = sadd.s32 1, %s21
    $region7: #{tpu_custom_call.1} parent=1 // loop_footer_branch
      %20 = sbr.rel target = $region3
    $region8: #{tpu_custom_call.1} parent=1 // loop_exit
      _
    %1316 = vsyncpa [#allocation3], 1
    %s1317 = scalar_lea.sflag [#allocation3], 1
    %1318 = vsyncpa %s1317, 1
    %1319 = vsyncpa [#allocation6], 1
    %1320 = vsyncpa [#allocation9], 1
    %1321 = vsyncpa [#allocation4], 1
    %s1322 = scalar_lea.sflag [#allocation4], 1
    %1323 = vsyncpa %s1322, 1

// kernel: tpu_custom_call.1
$region0: #{tpu_custom_call.1}
  #allocation0 [shape = 'u32[]', space=smem, size = 0x4, offset = 0x4, fixed_abs, tag = 'smem constant byte address 0x4 - core index']
  #allocation1 [shape = 'u32[144,128]{1,0:T(1,128)}', space=vmem, size = 0x12000, scoped, tag = 'internal scratch']
  %s0 = inlined_call_operand.hbm [shape: bf16[32,128], index: 0, kind: input, shape index: {}]
  %s1 = inlined_call_operand.hbm [shape: bf16[128,128], index: 1, kind: input, shape index: {}]
  %s2 = inlined_call_operand.vmem [shape: f32[1,128], index: 2, kind: input, shape index: {}]
  %s3 = inlined_call_operand.hbm [shape: bf16[6,128,128], index: 3, kind: input, shape index: {}]
  %s4 = inlined_call_operand.vmem [shape: f32[6,1,128], index: 4, kind: input, shape index: {}]
  %s5 = inlined_call_operand.hbm [shape: bf16[128,128], index: 5, kind: input, shape index: {}]
  %s6 = inlined_call_operand.vmem [shape: f32[1,128], index: 6, kind: input, shape index: {}]
  %s7 = inlined_call_operand.hbm [shape: f32[32,128], index: 7, kind: output, shape index: {}]
  %s8 = sld [smem:[#allocation0]]
  $region77: #{tpu_custom_call.1} parent=0
    _
  %s10 = ssub.s32 1, %s8
  %s11 = scalar_select 0, %s10, %s8
  $region1: #{tpu_custom_call.1} parent=0
    #allocation2 [shape = 'u8[8192]{0}', space=vmem, size = 0x2000, scoped, tag = 'input window, operand 0']
    #allocation3 [shape = 's32[2]{0}', space=sflag, size = 0x8, scoped, tag = 'scoped memory for tpu_custom_call.1']
    #allocation4 [shape = 's32[2]{0}', space=sflag, size = 0x8, scoped, tag = 'scoped memory for tpu_custom_call.1']
    #allocation5 [shape = 'u8[32768]{0}', space=vmem, size = 0x8000, scoped, tag = 'input window, operand 1, single buffered']
    #allocation6 [shape = 's32[1]{0}', space=sflag, size = 0x4, scoped, tag = 'scoped memory for tpu_custom_call.1']
    #allocation7 [shape = 'u8[196608]{0}', space=vmem, size = 0x30000, scoped, tag = 'input window, operand 3, single buffered']
    #allocation8 [shape = 'u8[32768]{0}', space=vmem, size = 0x8000, scoped, tag = 'input window, operand 5, single buffered']
    #allocation9 [shape = 's32[1]{0}', space=sflag, size = 0x4, scoped, tag = 'scoped memory for tpu_custom_call.1']
    #allocation10 [shape = 'u8[16384]{0}', space=vmem, size = 0x4000, scoped, tag = 'output window, operand 0']
    %12 = vsyncpa [#allocation3], 0
    %s13 = scalar_lea.sflag [#allocation3], 1
    %14 = vsyncpa %s13, 0
    %15 = vsyncpa [#allocation6], 0
    %16 = vsyncpa [#allocation9], 0
    %17 = vsyncpa [#allocation4], 0
    %s18 = scalar_lea.sflag [#allocation4], 1
    %19 = vsyncpa %s18, 0
    loop: start=0, step=1, limit=4
    $region2: #{tpu_custom_call.1} parent=1 // loop_pre_header
      _
    $region3: #{tpu_custom_call.1} parent=1 // loop_header
      %s21 = sphi 0, %s25
      %p22 = scmp.ge.s32.totalorder %s21, 4
      %s31 = sphi 0, %s33
      %s34 = sphi 0, %s31
      %s35 = sphi 0, %s34
      %s51 = sphi 0, %s35
      %s55 = sphi 0, %s55
      %s57 = sphi 0, %s55
      %s58 = sphi 0, %s57
      %s72 = sphi 0, %s58
      %s76 = sphi 0, %s76
      %s78 = sphi 0, %s76
      %s79 = sphi 0, %s78
      %s93 = sphi 0, %s79
      %s97 = sphi 0, %s97
      %s99 = sphi 0, %s97
      %s100 = sphi 0, %s99
      %s114 = sphi 0, %s100
      %s118 = sphi 0, %s118
      %s120 = sphi 0, %s118
      %s121 = sphi 0, %s120
      %s135 = sphi 0, %s121
      %s139 = sphi 0, %s139
      %s141 = sphi 0, %s139
      %s142 = sphi 0, %s141
      %s156 = sphi 0, %s142
      %s160 = sphi 0, %s160
      %s162 = sphi 0, %s160
      %s163 = sphi 0, %s162
      %s177 = sphi 0, %s163
      %s183 = sphi 0, %s185
      %s186 = sphi 0, %s183
      %s187 = sphi 0, %s186
      %s203 = sphi 0, %s187
    $region4: #{tpu_custom_call.1} parent=1 // loop_header_branch
      %24 = sbr.rel (%p22) target = $region8
    $region5: #{tpu_custom_call.1} parent=1 // loop_body
      %s26 = ssub.s32 %s21, 1
      %s27 = ssub.s32 %s21, 2
      %s28 = sadd.s32 %s21, 1
      %s29 = ssub.s32 %s21, %s28
      %p30 = scmp.eq.s32.totalorder %s29, 0
      %s32 = sadd.s32 %s31, 1
      %s33 = scalar_select %p30, %s31, %s32
      %p36 = pneg %p30
      %p37 = scmp.eq.s32.totalorder %s21, 1
      %p38 = por %p36, %p37
      %p39 = scmp.ne.s32.totalorder %s31, %s34
      %p40 = scmp.eq.s32.totalorder %s21, 0
      %p41 = por %p39, %p40
      %p42 = scmp.ne.s32.totalorder %s31, %s34
      %p43 = scmp.eq.s32.totalorder %s26, 1
      %p44 = por %p42, %p43
      %p45 = scmp.ne.s32.totalorder %s34, %s35
      %p46 = scmp.eq.s32.totalorder %s26, 0
      %p47 = por %p45, %p46
      %p48 = scmp.ne.s32.totalorder %s34, %s35
      %p49 = scmp.eq.s32.totalorder %s27, 1
      %p50 = por %p48, %p49
      %p52 = scmp.ne.s32.totalorder %s35, %s51
      %p53 = scmp.eq.s32.totalorder %s27, 0
      %p54 = por %p52, %p53
      %s56 = sadd.s32 %s55, 1
      %p59 = scmp.eq.s32.totalorder %s21, 1
      %p60 = scmp.ne.s32.totalorder %s55, %s57
      %p61 = scmp.eq.s32.totalorder %s21, 0
      %p62 = por %p60, %p61
      %p63 = scmp.ne.s32.totalorder %s55, %s57
      %p64 = scmp.eq.s32.totalorder %s26, 1
      %p65 = por %p63, %p64
      %p66 = scmp.ne.s32.totalorder %s57, %s58
      %p67 = scmp.eq.s32.totalorder %s26, 0
      %p68 = por %p66, %p67
      %p69 = scmp.ne.s32.totalorder %s57, %s58
      %p70 = scmp.eq.s32.totalorder %s27, 1
      %p71 = por %p69, %p70
      %p73 = scmp.ne.s32.totalorder %s58, %s72
      %p74 = scmp.eq.s32.totalorder %s27, 0
      %p75 = por %p73, %p74
      %s77 = sadd.s32 %s76, 1
      %p80 = scmp.eq.s32.totalorder %s21, 1
      %p81 = scmp.ne.s32.totalorder %s76, %s78
      %p82 = scmp.eq.s32.totalorder %s21, 0
      %p83 = por %p81, %p82
      %p84 = scmp.ne.s32.totalorder %s76, %s78
      %p85 = scmp.eq.s32.totalorder %s26, 1
      %p86 = por %p84, %p85
      %p87 = scmp.ne.s32.totalorder %s78, %s79
      %p88 = scmp.eq.s32.totalorder %s26, 0
      %p89 = por %p87, %p88
      %p90 = scmp.ne.s32.totalorder %s78, %s79
      %p91 = scmp.eq.s32.totalorder %s27, 1
      %p92 = por %p90, %p91
      %p94 = scmp.ne.s32.totalorder %s79, %s93
      %p95 = scmp.eq.s32.totalorder %s27, 0
      %p96 = por %p94, %p95
      %s98 = sadd.s32 %s97, 1
      %p101 = scmp.eq.s32.totalorder %s21, 1
      %p102 = scmp.ne.s32.totalorder %s97, %s99
      %p103 = scmp.eq.s32.totalorder %s21, 0
      %p104 = por %p102, %p103
      %p105 = scmp.ne.s32.totalorder %s97, %s99
      %p106 = scmp.eq.s32.totalorder %s26, 1
      %p107 = por %p105, %p106
      %p108 = scmp.ne.s32.totalorder %s99, %s100
      %p109 = scmp.eq.s32.totalorder %s26, 0
      %p110 = por %p108, %p109
      %p111 = scmp.ne.s32.totalorder %s99, %s100
      %p112 = scmp.eq.s32.totalorder %s27, 1
      %p113 = por %p111, %p112
      %p115 = scmp.ne.s32.totalorder %s100, %s114
      %p116 = scmp.eq.s32.totalorder %s27, 0
      %p117 = por %p115, %p116
      %s119 = sadd.s32 %s118, 1
      %p122 = scmp.eq.s32.totalorder %s21, 1
      %p123 = scmp.ne.s32.totalorder %s118, %s120
      %p124 = scmp.eq.s32.totalorder %s21, 0
      %p125 = por %p123, %p124
      %p126 = scmp.ne.s32.totalorder %s118, %s120
      %p127 = scmp.eq.s32.totalorder %s26, 1
      %p128 = por %p126, %p127
      %p129 = scmp.ne.s32.totalorder %s120, %s121
      %p130 = scmp.eq.s32.totalorder %s26, 0
      %p131 = por %p129, %p130
      %p132 = scmp.ne.s32.totalorder %s120, %s121
      %p133 = scmp.eq.s32.totalorder %s27, 1
      %p134 = por %p132, %p133
      %p136 = scmp.ne.s32.totalorder %s121, %s135
      %p137 = scmp.eq.s32.totalorder %s27, 0
      %p138 = por %p136, %p137
      %s140 = sadd.s32 %s139, 1
      %p143 = scmp.eq.s32.totalorder %s21, 1
      %p144 = scmp.ne.s32.totalorder %s139, %s141
      %p145 = scmp.eq.s32.totalorder %s21, 0
      %p146 = por %p144, %p145
      %p147 = scmp.ne.s32.totalorder %s139, %s141
      %p148 = scmp.eq.s32.totalorder %s26, 1
      %p149 = por %p147, %p148
      %p150 = scmp.ne.s32.totalorder %s141, %s142
      %p151 = scmp.eq.s32.totalorder %s26, 0
      %p152 = por %p150, %p151
      %p153 = scmp.ne.s32.totalorder %s141, %s142
      %p154 = scmp.eq.s32.totalorder %s27, 1
      %p155 = por %p153, %p154
      %p157 = scmp.ne.s32.totalorder %s142, %s156
      %p158 = scmp.eq.s32.totalorder %s27, 0
      %p159 = por %p157, %p158
      %s161 = sadd.s32 %s160, 1
      %p164 = scmp.eq.s32.totalorder %s21, 1
      %p165 = scmp.ne.s32.totalorder %s160, %s162
      %p166 = scmp.eq.s32.totalorder %s21, 0
      %p167 = por %p165, %p166
      %p168 = scmp.ne.s32.totalorder %s160, %s162
      %p169 = scmp.eq.s32.totalorder %s26, 1
      %p170 = por %p168, %p169
      %p171 = scmp.ne.s32.totalorder %s162, %s163
      %p172 = scmp.eq.s32.totalorder %s26, 0
      %p173 = por %p171, %p172
      %p174 = scmp.ne.s32.totalorder %s162, %s163
      %p175 = scmp.eq.s32.totalorder %s27, 1
      %p176 = por %p174, %p175
      %p178 = scmp.ne.s32.totalorder %s163, %s177
      %p179 = scmp.eq.s32.totalorder %s27, 0
      %p180 = por %p178, %p179
      %s181 = ssub.s32 %s21, %s28
      %p182 = scmp.eq.s32.totalorder %s181, 0
      %s184 = sadd.s32 %s183, 1
      %s185 = scalar_select %p182, %s183, %s184
      %p188 = pneg %p182
      %p189 = scmp.eq.s32.totalorder %s21, 1
      %p190 = por %p188, %p189
      %p191 = scmp.ne.s32.totalorder %s183, %s186
      %p192 = scmp.eq.s32.totalorder %s21, 0
      %p193 = por %p191, %p192
      %p194 = scmp.ne.s32.totalorder %s183, %s186
      %p195 = scmp.eq.s32.totalorder %s26, 1
      %p196 = por %p194, %p195
      %p197 = scmp.ne.s32.totalorder %s186, %s187
      %p198 = scmp.eq.s32.totalorder %s26, 0
      %p199 = por %p197, %p198
      %p200 = scmp.ne.s32.totalorder %s186, %s187
      %p201 = scmp.eq.s32.totalorder %s27, 1
      %p202 = por %p200, %p201
      %p204 = scmp.ne.s32.totalorder %s187, %s203
      %p205 = scmp.eq.s32.totalorder %s27, 0
      %p206 = por %p204, %p205
      %p207 = scmp.le.s32.totalorder 1, %s21
      %p208 = scmp.lt.s32.totalorder %s21, 3
      %p209 = pnand %p207, %p208
      %p210 = pneg %p209
      // Predicated region
      $region9: #{tpu_custom_call.1} parent=5 // pred_check
        _
      $region10: #{tpu_custom_call.1} parent=5 // pred_check_branch
        %212 = sbr.rel (%p209) target = $region12
      $region11: #{tpu_custom_call.1} parent=5 // pred_region
        %s213 = ssub.s32 %s21, 1
        // Predicated region
        $region13: #{tpu_custom_call.1} parent=11 // pred_check
          %p214 = pneg %p68
        $region14: #{tpu_custom_call.1} parent=11 // pred_check_branch
          %216 = sbr.rel (%p214) target = $region16
        $region15: #{tpu_custom_call.1} parent=11 // pred_region
          %s218 = ssub.s32 1024, 1024
          %219 = vsyncadd [#allocation6], %s218
          %s220 = sshll.u32 [#allocation5], 4
          %s221 = int_to_ptr.vmem [resolvable:$true] %s220
          %226 = dma.hbm_to_vmem [thread:$0]  %s1, 1024, %s221, [#allocation6], 64, 64, 4
        $region16: #{tpu_custom_call.1} parent=11 // pred_fallthru
          _
        // Predicated region
        $region17: #{tpu_custom_call.1} parent=11 // pred_check
          %p227 = pneg %p89
        $region18: #{tpu_custom_call.1} parent=11 // pred_check_branch
          %229 = sbr.rel (%p227) target = $region20
        $region19: #{tpu_custom_call.1} parent=11 // pred_region
          _
        $region20: #{tpu_custom_call.1} parent=11 // pred_fallthru
          _
        // Predicated region
        $region21: #{tpu_custom_call.1} parent=11 // pred_check
          %p230 = pneg %p110
        $region22: #{tpu_custom_call.1} parent=11 // pred_check_branch
          %232 = sbr.rel (%p230) target = $region24
        $region23: #{tpu_custom_call.1} parent=11 // pred_region
          %s234 = ssub.s32 6144, 6144
          %235 = vsyncadd [#allocation6], %s234
          %s236 = sshll.u32 [#allocation7], 4
          %s237 = int_to_ptr.vmem [resolvable:$true] %s236
          %242 = dma.hbm_to_vmem [thread:$0]  %s3, 6144, %s237, [#allocation6], 64, 64, 4
        $region24: #{tpu_custom_call.1} parent=11 // pred_fallthru
          _
        // Predicated region
        $region25: #{tpu_custom_call.1} parent=11 // pred_check
          %p243 = pneg %p131
        $region26: #{tpu_custom_call.1} parent=11 // pred_check_branch
          %245 = sbr.rel (%p243) target = $region28
        $region27: #{tpu_custom_call.1} parent=11 // pred_region
          _
        $region28: #{tpu_custom_call.1} parent=11 // pred_fallthru
          _
        // Predicated region
        $region29: #{tpu_custom_call.1} parent=11 // pred_check
          %p246 = pneg %p152
        $region30: #{tpu_custom_call.1} parent=11 // pred_check_branch
          %248 = sbr.rel (%p246) target = $region32
        $region31: #{tpu_custom_call.1} parent=11 // pred_region
          %s250 = ssub.s32 1024, 1024
          %251 = vsyncadd [#allocation9], %s250
          %s252 = sshll.u32 [#allocation8], 4
          %s253 = int_to_ptr.vmem [resolvable:$true] %s252
          %258 = dma.hbm_to_vmem [thread:$0]  %s5, 1024, %s253, [#allocation9], 64, 64, 4
        $region32: #{tpu_custom_call.1} parent=11 // pred_fallthru
          _
        // Predicated region
        $region33: #{tpu_custom_call.1} parent=11 // pred_check
          %p259 = pneg %p173
        $region34: #{tpu_custom_call.1} parent=11 // pred_check_branch
          %261 = sbr.rel (%p259) target = $region36
        $region35: #{tpu_custom_call.1} parent=11 // pred_region
          _
        $region36: #{tpu_custom_call.1} parent=11 // pred_fallthru
          _
      $region12: #{tpu_custom_call.1} parent=5 // pred_fallthru
        _
      %p262 = scmp.lt.s32.totalorder %s21, 2
      // Predicated region
      $region37: #{tpu_custom_call.1} parent=5 // pred_check
        %p263 = pneg %p262
      $region38: #{tpu_custom_call.1} parent=5 // pred_check_branch
        %265 = sbr.rel (%p263) target = $region40
      $region39: #{tpu_custom_call.1} parent=5 // pred_region
        // Predicated region
        $region41: #{tpu_custom_call.1} parent=39 // pred_check
          %p266 = pneg %p41
        $region42: #{tpu_custom_call.1} parent=39 // pred_check_branch
          %268 = sbr.rel (%p266) target = $region44
        $region43: #{tpu_custom_call.1} parent=39 // pred_region
          %s269 = sand.u32 %s31, 1
          %s270 = scalar_lea.sflag [#allocation3], %s269
          %s271 = sand.u32 %s31, 1
          %s272 = smul.addr %s271, 8
          %s273 = scalar_lea.vmem [#allocation2], %s272
          %s274 = smul.u32 2, %s21
          %s276 = ssub.s32 128, 128
          %277 = vsyncadd %s270, %s276
          %s278 = smul.addr %s274, 64
          %s279 = scalar_lea.hbm %s0, %s278
          %s280 = sshll.u32 %s273, 4
          %s281 = int_to_ptr.vmem [resolvable:$true] %s280
          %286 = dma.hbm_to_vmem [thread:$0]  %s279, 128, %s281, %s270, 64, 64, 4
        $region44: #{tpu_custom_call.1} parent=39 // pred_fallthru
          _
      $region40: #{tpu_custom_call.1} parent=5 // pred_fallthru
        _
      %p287 = scmp.le.s32.totalorder 1, %s21
      %p288 = scmp.lt.s32.totalorder %s21, 3
      %p289 = pnand %p287, %p288
      %p290 = pneg %p289
      // Predicated region
      $region45: #{tpu_custom_call.1} parent=5 // pred_check
        _
      $region46: #{tpu_custom_call.1} parent=5 // pred_check_branch
        %292 = sbr.rel (%p289) target = $region48
      $region47: #{tpu_custom_call.1} parent=5 // pred_region
        %s293 = ssub.s32 %s21, 1
        %s294 = sand.u32 %s34, 1
        %s295 = scalar_lea.sflag [#allocation3], %s294
        %s296 = sand.u32 %s34, 1
        %s297 = smul.addr %s296, 8
        %s298 = scalar_lea.vmem [#allocation2], %s297
        // Predicated region
        $region49: #{tpu_custom_call.1} parent=47 // pred_check
          %p299 = pneg %p47
        $region50: #{tpu_custom_call.1} parent=47 // pred_check_branch
          %301 = sbr.rel (%p299) target = $region52
        $region51: #{tpu_custom_call.1} parent=47 // pred_region
          %302 = dma.done %s295, 128
        $region52: #{tpu_custom_call.1} parent=47 // pred_fallthru
          _
        // Predicated region
        $region53: #{tpu_custom_call.1} parent=47 // pred_check
          %p303 = pneg %p68
        $region54: #{tpu_custom_call.1} parent=47 // pred_check_branch
          %305 = sbr.rel (%p303) target = $region56
        $region55: #{tpu_custom_call.1} parent=47 // pred_region
          %306 = dma.done [#allocation6], 1024
        $region56: #{tpu_custom_call.1} parent=47 // pred_fallthru
          _
        // Predicated region
        $region57: #{tpu_custom_call.1} parent=47 // pred_check
          %p307 = pneg %p110
        $region58: #{tpu_custom_call.1} parent=47 // pred_check_branch
          %309 = sbr.rel (%p307) target = $region60
        $region59: #{tpu_custom_call.1} parent=47 // pred_region
          %310 = dma.done [#allocation6], 6144
        $region60: #{tpu_custom_call.1} parent=47 // pred_fallthru
          _
        // Predicated region
        $region61: #{tpu_custom_call.1} parent=47 // pred_check
          %p311 = pneg %p152
        $region62: #{tpu_custom_call.1} parent=47 // pred_check_branch
          %313 = sbr.rel (%p311) target = $region64
        $region63: #{tpu_custom_call.1} parent=47 // pred_region
          %314 = dma.done [#allocation9], 1024
        $region64: #{tpu_custom_call.1} parent=47 // pred_fallthru
          _
        %s315 = sand.u32 %s34, 1
        %s316 = scalar_lea.sflag [#allocation3], %s315
        %s317 = sand.u32 %s34, 1
        %s318 = smul.addr %s317, 8
        %s319 = scalar_lea.vmem [#allocation2], %s318
        %p320 = pneg %p47
        %p321 = pneg %p44
        %p322 = pneg %p68
        %p323 = pneg %p65
        %p324 = pneg %p89
        %p325 = pneg %p86
        %p326 = pneg %p110
        %p327 = pneg %p107
        %p328 = pneg %p131
        %p329 = pneg %p128
        %p330 = pneg %p152
        %p331 = pneg %p149
        %p332 = pneg %p173
        %p333 = pneg %p170
        %p334 = pneg %p199
        %p335 = pneg %p196
        %s336 = sand.u32 %s186, 1
        %s337 = scalar_lea.sflag [#allocation4], %s336
        %s338 = sand.u32 %s186, 1
        %s339 = smul.addr %s338, 16
        %s340 = scalar_lea.vmem [#allocation10], %s339
        %s341 = smul.u32 2, %s26
        %s342 = smul.u32 2, %s26
        %v344 = vld [vmem:[%s298] sm:$0xf]
        %v345 = vld [vmem:[%s298 + $0x4] sm:$0xf]
        %v346 = vld [vmem:[#allocation5] sm:$0xf]
        %v347 = vld [vmem:[#allocation5 + $0x4] sm:$0xf]
        %v348 = vld [vmem:[#allocation5 + $0x8] sm:$0xf]
        %v349 = vld [vmem:[#allocation5 + $0xc] sm:$0xf]
        %v350 = vld [vmem:[#allocation5 + $0x10] sm:$0xf]
        %v351 = vld [vmem:[#allocation5 + $0x14] sm:$0xf]
        %v352 = vld [vmem:[#allocation5 + $0x18] sm:$0xf]
        %v353 = vld [vmem:[#allocation5 + $0x1c] sm:$0xf]
        %v354 = vld [vmem:[#allocation5 + $0x20] sm:$0xf]
        %v355 = vld [vmem:[#allocation5 + $0x24] sm:$0xf]
        %v356 = vld [vmem:[#allocation5 + $0x28] sm:$0xf]
        %v357 = vld [vmem:[#allocation5 + $0x2c] sm:$0xf]
        %v358 = vld [vmem:[#allocation5 + $0x30] sm:$0xf]
        %v359 = vld [vmem:[#allocation5 + $0x34] sm:$0xf]
        %v360 = vld [vmem:[#allocation5 + $0x38] sm:$0xf]
        %v361 = vld [vmem:[#allocation5 + $0x3c] sm:$0xf]
        %v362 = vld [vmem:[%s2] sm:$0x1]
        %v364 = vlaneseq
        %v365 = vshrl.u32 %v364, 7
        %v366 = vsub.s32 0, %v365
        %v367 = vrot.slane %v362, %v366
        %v371 = vunpack.c.l.b16 %v344
        %v372 = vunpack.c.l.b16 %v345
        %v373 = vpack.c.b16 %v372, %v371
        %v391 = vunpack.c.l.b16 %v346
        %v392 = vunpack.c.l.b16 %v347
        %v393 = vunpack.c.l.b16 %v348
        %v394 = vunpack.c.l.b16 %v349
        %v395 = vunpack.c.l.b16 %v350
        %v396 = vunpack.c.l.b16 %v351
        %v397 = vunpack.c.l.b16 %v352
        %v398 = vunpack.c.l.b16 %v353
        %v399 = vunpack.c.l.b16 %v354
        %v400 = vunpack.c.l.b16 %v355
        %v401 = vunpack.c.l.b16 %v356
        %v402 = vunpack.c.l.b16 %v357
        %v403 = vunpack.c.l.b16 %v358
        %v404 = vunpack.c.l.b16 %v359
        %v405 = vunpack.c.l.b16 %v360
        %v406 = vunpack.c.l.b16 %v361
        %v407 = vpack.c.b16 %v392, %v391
        %v408 = vpack.c.b16 %v394, %v393
        %v409 = vpack.c.b16 %v396, %v395
        %v410 = vpack.c.b16 %v398, %v397
        %v411 = vpack.c.b16 %v400, %v399
        %v412 = vpack.c.b16 %v402, %v401
        %v413 = vpack.c.b16 %v404, %v403
        %v414 = vpack.c.b16 %v406, %v405
        %423 = vmatprep.subr.bf16.mxu0 0
        %424 = vmatpush1.bf16.msra.mxu0 %v407
        %425 = vmatprep.subr.bf16.mxu0 0
        %426 = vmatpush1.bf16.msra.mxu0 %v408
        %427 = vmatprep.subr.bf16.mxu0 0
        %428 = vmatpush1.bf16.msra.mxu0 %v409
        %429 = vmatprep.subr.bf16.mxu0 0
        %430 = vmatpush1.bf16.msra.mxu0 %v410
        %431 = vmatprep.subr.bf16.mxu0 0
        %432 = vmatpush1.bf16.msra.mxu0 %v411
        %433 = vmatprep.subr.bf16.mxu0 0
        %434 = vmatpush1.bf16.msra.mxu0 %v412
        %435 = vmatprep.subr.bf16.mxu0 0
        %436 = vmatpush1.bf16.msra.mxu0 %v413
        %437 = vmatprep.subr.bf16.mxu0 0
        %438 = vmatpush1.bf16.msra.mxu0 %v414
        %439 = vmatprep.subr.bf16.mxu0 0
        %440 = vmatpush1.bf16.msra.mxu0 0
        %441 = vmatprep.subr.bf16.mxu0 0
        %442 = vmatpush1.bf16.msra.mxu0 0
        %443 = vmatprep.subr.bf16.mxu0 0
        %444 = vmatpush1.bf16.msra.mxu0 0
        %445 = vmatprep.subr.bf16.mxu0 0
        %446 = vmatpush1.bf16.msra.mxu0 0
        %447 = vmatprep.subr.bf16.mxu0 0
        %448 = vmatpush1.bf16.msra.mxu0 0
        %449 = vmatprep.subr.bf16.mxu0 0
        %450 = vmatpush1.bf16.msra.mxu0 0
        %451 = vmatprep.subr.bf16.mxu0 0
        %452 = vmatpush1.bf16.msra.mxu0 0
        %453 = vmatprep.subr.bf16.mxu0 0
        %454 = vmatpush1.bf16.msra.mxu0 0
        %455 = vmatprep.mubr.bf16.mxu0 0
        %456 = vmatmul.mubr.bf16.gmra.mrb[0].mxu0 %v373
        %v457 = vpop.f32.mrb[0].mxu0
        %v458 = vadd.f32 %v367, %v457
        %v459 = vpop.f32.mrb[0].mxu0
        %v460 = vpop.f32.mrb[0].mxu0
        %v461 = vadd.f32 %v367, %v460
        %v462 = vpop.f32.mrb[0].mxu0
        %463 = vdwg.mxu0
        %v464 = vmax.f32 %v458, 0.0
        %v465 = vmax.f32 %v461, 0.0
        %v466 = vld [vmem:[#allocation7] sm:$0xf]
        %v467 = vld [vmem:[#allocation7 + $0x4] sm:$0xf]
        %v468 = vld [vmem:[#allocation7 + $0x8] sm:$0xf]
        %v469 = vld [vmem:[#allocation7 + $0xc] sm:$0xf]
        %v470 = vld [vmem:[#allocation7 + $0x10] sm:$0xf]
        %v471 = vld [vmem:[#allocation7 + $0x14] sm:$0xf]
        %v472 = vld [vmem:[#allocation7 + $0x18] sm:$0xf]
        %v473 = vld [vmem:[#allocation7 + $0x1c] sm:$0xf]
        %v474 = vld [vmem:[#allocation7 + $0x20] sm:$0xf]
        %v475 = vld [vmem:[#allocation7 + $0x24] sm:$0xf]
        %v476 = vld [vmem:[#allocation7 + $0x28] sm:$0xf]
        %v477 = vld [vmem:[#allocation7 + $0x2c] sm:$0xf]
        %v478 = vld [vmem:[#allocation7 + $0x30] sm:$0xf]
        %v479 = vld [vmem:[#allocation7 + $0x34] sm:$0xf]
        %v480 = vld [vmem:[#allocation7 + $0x38] sm:$0xf]
        %v481 = vld [vmem:[#allocation7 + $0x3c] sm:$0xf]
        %v482 = vld [vmem:[%s4] sm:$0x1]
        %v483 = vpack.c.bf16 %v465, %v464
        %v485 = vlaneseq
        %v486 = vshrl.u32 %v485, 7
        %v487 = vsub.s32 0, %v486
        %v488 = vrot.slane %v482, %v487
        %v506 = vunpack.c.l.b16 %v466
        %v507 = vunpack.c.l.b16 %v467
        %v508 = vunpack.c.l.b16 %v468
        %v509 = vunpack.c.l.b16 %v469
        %v510 = vunpack.c.l.b16 %v470
        %v511 = vunpack.c.l.b16 %v471
        %v512 = vunpack.c.l.b16 %v472
        %v513 = vunpack.c.l.b16 %v473
        %v514 = vunpack.c.l.b16 %v474
        %v515 = vunpack.c.l.b16 %v475
        %v516 = vunpack.c.l.b16 %v476
        %v517 = vunpack.c.l.b16 %v477
        %v518 = vunpack.c.l.b16 %v478
        %v519 = vunpack.c.l.b16 %v479
        %v520 = vunpack.c.l.b16 %v480
        %v521 = vunpack.c.l.b16 %v481
        %v522 = vpack.c.b16 %v507, %v506
        %v523 = vpack.c.b16 %v509, %v508
        %v524 = vpack.c.b16 %v511, %v510
        %v525 = vpack.c.b16 %v513, %v512
        %v526 = vpack.c.b16 %v515, %v514
        %v527 = vpack.c.b16 %v517, %v516
        %v528 = vpack.c.b16 %v519, %v518
        %v529 = vpack.c.b16 %v521, %v520
        %538 = vmatprep.subr.bf16.mxu0 0
        %539 = vmatpush1.bf16.msra.mxu0 %v522
        %540 = vmatprep.subr.bf16.mxu0 0
        %541 = vmatpush1.bf16.msra.mxu0 %v523
        %542 = vmatprep.subr.bf16.mxu0 0
        %543 = vmatpush1.bf16.msra.mxu0 %v524
        %544 = vmatprep.subr.bf16.mxu0 0
        %545 = vmatpush1.bf16.msra.mxu0 %v525
        %546 = vmatprep.subr.bf16.mxu0 0
        %547 = vmatpush1.bf16.msra.mxu0 %v526
        %548 = vmatprep.subr.bf16.mxu0 0
        %549 = vmatpush1.bf16.msra.mxu0 %v527
        %550 = vmatprep.subr.bf16.mxu0 0
        %551 = vmatpush1.bf16.msra.mxu0 %v528
        %552 = vmatprep.subr.bf16.mxu0 0
        %553 = vmatpush1.bf16.msra.mxu0 %v529
        %554 = vmatprep.subr.bf16.mxu0 0
        %555 = vmatpush1.bf16.msra.mxu0 0
        %556 = vmatprep.subr.bf16.mxu0 0
        %557 = vmatpush1.bf16.msra.mxu0 0
        %558 = vmatprep.subr.bf16.mxu0 0
        %559 = vmatpush1.bf16.msra.mxu0 0
        %560 = vmatprep.subr.bf16.mxu0 0
        %561 = vmatpush1.bf16.msra.mxu0 0
        %562 = vmatprep.subr.bf16.mxu0 0
        %563 = vmatpush1.bf16.msra.mxu0 0
        %564 = vmatprep.subr.bf16.mxu0 0
        %565 = vmatpush1.bf16.msra.mxu0 0
        %566 = vmatprep.subr.bf16.mxu0 0
        %567 = vmatpush1.bf16.msra.mxu0 0
        %568 = vmatprep.subr.bf16.mxu0 0
        %569 = vmatpush1.bf16.msra.mxu0 0
        %570 = vmatprep.mubr.bf16.mxu0 0
        %571 = vmatmul.mubr.bf16.gmra.mrb[0].mxu0 %v483
        %v572 = vpop.f32.mrb[0].mxu0
        %v573 = vadd.f32 %v488, %v572
        %v574 = vpop.f32.mrb[0].mxu0
        %v575 = vpop.f32.mrb[0].mxu0
        %v576 = vadd.f32 %v488, %v575
        %v577 = vpop.f32.mrb[0].mxu0
        %578 = vdwg.mxu0
        %v579 = vmax.f32 %v573, 0.0
        %v580 = vmax.f32 %v576, 0.0
        %s581 = scalar_lea.vmem [#allocation7], 64
        %v582 = vld [vmem:[%s581] sm:$0xf]
        %v583 = vld [vmem:[%s581 + $0x4] sm:$0xf]
        %v584 = vld [vmem:[%s581 + $0x8] sm:$0xf]
        %v585 = vld [vmem:[%s581 + $0xc] sm:$0xf]
        %v586 = vld [vmem:[%s581 + $0x10] sm:$0xf]
        %v587 = vld [vmem:[%s581 + $0x14] sm:$0xf]
        %v588 = vld [vmem:[%s581 + $0x18] sm:$0xf]
        %v589 = vld [vmem:[%s581 + $0x1c] sm:$0xf]
        %v590 = vld [vmem:[%s581 + $0x20] sm:$0xf]
        %v591 = vld [vmem:[%s581 + $0x24] sm:$0xf]
        %v592 = vld [vmem:[%s581 + $0x28] sm:$0xf]
        %v593 = vld [vmem:[%s581 + $0x2c] sm:$0xf]
        %v594 = vld [vmem:[%s581 + $0x30] sm:$0xf]
        %v595 = vld [vmem:[%s581 + $0x34] sm:$0xf]
        %v596 = vld [vmem:[%s581 + $0x38] sm:$0xf]
        %v597 = vld [vmem:[%s581 + $0x3c] sm:$0xf]
        %s598 = scalar_lea.vmem %s4, 1
        %v599 = vld [vmem:[%s598] sm:$0x1]
        %v600 = vpack.c.bf16 %v580, %v579
        %v602 = vlaneseq
        %v603 = vshrl.u32 %v602, 7
        %v604 = vsub.s32 0, %v603
        %v605 = vrot.slane %v599, %v604
        %v623 = vunpack.c.l.b16 %v582
        %v624 = vunpack.c.l.b16 %v583
        %v625 = vunpack.c.l.b16 %v584
        %v626 = vunpack.c.l.b16 %v585
        %v627 = vunpack.c.l.b16 %v586
        %v628 = vunpack.c.l.b16 %v587
        %v629 = vunpack.c.l.b16 %v588
        %v630 = vunpack.c.l.b16 %v589
        %v631 = vunpack.c.l.b16 %v590
        %v632 = vunpack.c.l.b16 %v591
        %v633 = vunpack.c.l.b16 %v592
        %v634 = vunpack.c.l.b16 %v593
        %v635 = vunpack.c.l.b16 %v594
        %v636 = vunpack.c.l.b16 %v595
        %v637 = vunpack.c.l.b16 %v596
        %v638 = vunpack.c.l.b16 %v597
        %v639 = vpack.c.b16 %v624, %v623
        %v640 = vpack.c.b16 %v626, %v625
        %v641 = vpack.c.b16 %v628, %v627
        %v642 = vpack.c.b16 %v630, %v629
        %v643 = vpack.c.b16 %v632, %v631
        %v644 = vpack.c.b16 %v634, %v633
        %v645 = vpack.c.b16 %v636, %v635
        %v646 = vpack.c.b16 %v638, %v637
        %655 = vmatprep.subr.bf16.mxu0 0
        %656 = vmatpush1.bf16.msra.mxu0 %v639
        %657 = vmatprep.subr.bf16.mxu0 0
        %658 = vmatpush1.bf16.msra.mxu0 %v640
        %659 = vmatprep.subr.bf16.mxu0 0
        %660 = vmatpush1.bf16.msra.mxu0 %v641
        %661 = vmatprep.subr.bf16.mxu0 0
        %662 = vmatpush1.bf16.msra.mxu0 %v642
        %663 = vmatprep.subr.bf16.mxu0 0
        %664 = vmatpush1.bf16.msra.mxu0 %v643
        %665 = vmatprep.subr.bf16.mxu0 0
        %666 = vmatpush1.bf16.msra.mxu0 %v644
        %667 = vmatprep.subr.bf16.mxu0 0
        %668 = vmatpush1.bf16.msra.mxu0 %v645
        %669 = vmatprep.subr.bf16.mxu0 0
        %670 = vmatpush1.bf16.msra.mxu0 %v646
        %671 = vmatprep.subr.bf16.mxu0 0
        %672 = vmatpush1.bf16.msra.mxu0 0
        %673 = vmatprep.subr.bf16.mxu0 0
        %674 = vmatpush1.bf16.msra.mxu0 0
        %675 = vmatprep.subr.bf16.mxu0 0
        %676 = vmatpush1.bf16.msra.mxu0 0
        %677 = vmatprep.subr.bf16.mxu0 0
        %678 = vmatpush1.bf16.msra.mxu0 0
        %679 = vmatprep.subr.bf16.mxu0 0
        %680 = vmatpush1.bf16.msra.mxu0 0
        %681 = vmatprep.subr.bf16.mxu0 0
        %682 = vmatpush1.bf16.msra.mxu0 0
        %683 = vmatprep.subr.bf16.mxu0 0
        %684 = vmatpush1.bf16.msra.mxu0 0
        %685 = vmatprep.subr.bf16.mxu0 0
        %686 = vmatpush1.bf16.msra.mxu0 0
        %687 = vmatprep.mubr.bf16.mxu0 0
        %688 = vmatmul.mubr.bf16.gmra.mrb[0].mxu0 %v600
        %v689 = vpop.f32.mrb[0].mxu0
        %v690 = vadd.f32 %v605, %v689
        %v691 = vpop.f32.mrb[0].mxu0
        %v692 = vpop.f32.mrb[0].mxu0
        %v693 = vadd.f32 %v605, %v692
        %v694 = vpop.f32.mrb[0].mxu0
        %695 = vdwg.mxu0
        %v696 = vmax.f32 %v690, 0.0
        %v697 = vmax.f32 %v693, 0.0
        %s698 = scalar_lea.vmem [#allocation7], 128
        %v699 = vld [vmem:[%s698] sm:$0xf]
        %v700 = vld [vmem:[%s698 + $0x4] sm:$0xf]
        %v701 = vld [vmem:[%s698 + $0x8] sm:$0xf]
        %v702 = vld [vmem:[%s698 + $0xc] sm:$0xf]
        %v703 = vld [vmem:[%s698 + $0x10] sm:$0xf]
        %v704 = vld [vmem:[%s698 + $0x14] sm:$0xf]
        %v705 = vld [vmem:[%s698 + $0x18] sm:$0xf]
        %v706 = vld [vmem:[%s698 + $0x1c] sm:$0xf]
        %v707 = vld [vmem:[%s698 + $0x20] sm:$0xf]
        %v708 = vld [vmem:[%s698 + $0x24] sm:$0xf]
        %v709 = vld [vmem:[%s698 + $0x28] sm:$0xf]
        %v710 = vld [vmem:[%s698 + $0x2c] sm:$0xf]
        %v711 = vld [vmem:[%s698 + $0x30] sm:$0xf]
        %v712 = vld [vmem:[%s698 + $0x34] sm:$0xf]
        %v713 = vld [vmem:[%s698 + $0x38] sm:$0xf]
        %v714 = vld [vmem:[%s698 + $0x3c] sm:$0xf]
        %s715 = scalar_lea.vmem %s4, 2
        %v716 = vld [vmem:[%s715] sm:$0x1]
        %v717 = vpack.c.bf16 %v697, %v696
        %v719 = vlaneseq
        %v720 = vshrl.u32 %v719, 7
        %v721 = vsub.s32 0, %v720
        %v722 = vrot.slane %v716, %v721
        %v740 = vunpack.c.l.b16 %v699
        %v741 = vunpack.c.l.b16 %v700
        %v742 = vunpack.c.l.b16 %v701
        %v743 = vunpack.c.l.b16 %v702
        %v744 = vunpack.c.l.b16 %v703
        %v745 = vunpack.c.l.b16 %v704
        %v746 = vunpack.c.l.b16 %v705
        %v747 = vunpack.c.l.b16 %v706
        %v748 = vunpack.c.l.b16 %v707
        %v749 = vunpack.c.l.b16 %v708
        %v750 = vunpack.c.l.b16 %v709
        %v751 = vunpack.c.l.b16 %v710
        %v752 = vunpack.c.l.b16 %v711
        %v753 = vunpack.c.l.b16 %v712
        %v754 = vunpack.c.l.b16 %v713
        %v755 = vunpack.c.l.b16 %v714
        %v756 = vpack.c.b16 %v741, %v740
        %v757 = vpack.c.b16 %v743, %v742
        %v758 = vpack.c.b16 %v745, %v744
        %v759 = vpack.c.b16 %v747, %v746
        %v760 = vpack.c.b16 %v749, %v748
        %v761 = vpack.c.b16 %v751, %v750
        %v762 = vpack.c.b16 %v753, %v752
        %v763 = vpack.c.b16 %v755, %v754
        %772 = vmatprep.subr.bf16.mxu0 0
        %773 = vmatpush1.bf16.msra.mxu0 %v756
        %774 = vmatprep.subr.bf16.mxu0 0
        %775 = vmatpush1.bf16.msra.mxu0 %v757
        %776 = vmatprep.subr.bf16.mxu0 0
        %777 = vmatpush1.bf16.msra.mxu0 %v758
        %778 = vmatprep.subr.bf16.mxu0 0
        %779 = vmatpush1.bf16.msra.mxu0 %v759
        %780 = vmatprep.subr.bf16.mxu0 0
        %781 = vmatpush1.bf16.msra.mxu0 %v760
        %782 = vmatprep.subr.bf16.mxu0 0
        %783 = vmatpush1.bf16.msra.mxu0 %v761
        %784 = vmatprep.subr.bf16.mxu0 0
        %785 = vmatpush1.bf16.msra.mxu0 %v762
        %786 = vmatprep.subr.bf16.mxu0 0
        %787 = vmatpush1.bf16.msra.mxu0 %v763
        %788 = vmatprep.subr.bf16.mxu0 0
        %789 = vmatpush1.bf16.msra.mxu0 0
        %790 = vmatprep.subr.bf16.mxu0 0
        %791 = vmatpush1.bf16.msra.mxu0 0
        %792 = vmatprep.subr.bf16.mxu0 0
        %793 = vmatpush1.bf16.msra.mxu0 0
        %794 = vmatprep.subr.bf16.mxu0 0
        %795 = vmatpush1.bf16.msra.mxu0 0
        %796 = vmatprep.subr.bf16.mxu0 0
        %797 = vmatpush1.bf16.msra.mxu0 0
        %798 = vmatprep.subr.bf16.mxu0 0
        %799 = vmatpush1.bf16.msra.mxu0 0
        %800 = vmatprep.subr.bf16.mxu0 0
        %801 = vmatpush1.bf16.msra.mxu0 0
        %802 = vmatprep.subr.bf16.mxu0 0
        %803 = vmatpush1.bf16.msra.mxu0 0
        %804 = vmatprep.mubr.bf16.mxu0 0
        %805 = vmatmul.mubr.bf16.gmra.mrb[0].mxu0 %v717
        %v806 = vpop.f32.mrb[0].mxu0
        %v807 = vadd.f32 %v722, %v806
        %v808 = vpop.f32.mrb[0].mxu0
        %v809 = vpop.f32.mrb[0].mxu0
        %v810 = vadd.f32 %v722, %v809
        %v811 = vpop.f32.mrb[0].mxu0
        %812 = vdwg.mxu0
        %v813 = vmax.f32 %v807, 0.0
        %v814 = vmax.f32 %v810, 0.0
        %s815 = scalar_lea.vmem [#allocation7], 192
        %v816 = vld [vmem:[%s815] sm:$0xf]
        %v817 = vld [vmem:[%s815 + $0x4] sm:$0xf]
        %v818 = vld [vmem:[%s815 + $0x8] sm:$0xf]
        %v819 = vld [vmem:[%s815 + $0xc] sm:$0xf]
        %v820 = vld [vmem:[%s815 + $0x10] sm:$0xf]
        %v821 = vld [vmem:[%s815 + $0x14] sm:$0xf]
        %v822 = vld [vmem:[%s815 + $0x18] sm:$0xf]
        %v823 = vld [vmem:[%s815 + $0x1c] sm:$0xf]
        %v824 = vld [vmem:[%s815 + $0x20] sm:$0xf]
        %v825 = vld [vmem:[%s815 + $0x24] sm:$0xf]
        %v826 = vld [vmem:[%s815 + $0x28] sm:$0xf]
        %v827 = vld [vmem:[%s815 + $0x2c] sm:$0xf]
        %v828 = vld [vmem:[%s815 + $0x30] sm:$0xf]
        %v829 = vld [vmem:[%s815 + $0x34] sm:$0xf]
        %v830 = vld [vmem:[%s815 + $0x38] sm:$0xf]
        %v831 = vld [vmem:[%s815 + $0x3c] sm:$0xf]
        %s832 = scalar_lea.vmem %s4, 3
        %v833 = vld [vmem:[%s832] sm:$0x1]
        %v834 = vpack.c.bf16 %v814, %v813
        %v836 = vlaneseq
        %v837 = vshrl.u32 %v836, 7
        %v838 = vsub.s32 0, %v837
        %v839 = vrot.slane %v833, %v838
        %v857 = vunpack.c.l.b16 %v816
        %v858 = vunpack.c.l.b16 %v817
        %v859 = vunpack.c.l.b16 %v818
        %v860 = vunpack.c.l.b16 %v819
        %v861 = vunpack.c.l.b16 %v820
        %v862 = vunpack.c.l.b16 %v821
        %v863 = vunpack.c.l.b16 %v822
        %v864 = vunpack.c.l.b16 %v823
        %v865 = vunpack.c.l.b16 %v824
        %v866 = vunpack.c.l.b16 %v825
        %v867 = vunpack.c.l.b16 %v826
        %v868 = vunpack.c.l.b16 %v827
        %v869 = vunpack.c.l.b16 %v828
        %v870 = vunpack.c.l.b16 %v829
        %v871 = vunpack.c.l.b16 %v830
        %v872 = vunpack.c.l.b16 %v831
        %v873 = vpack.c.b16 %v858, %v857
        %v874 = vpack.c.b16 %v860, %v859
        %v875 = vpack.c.b16 %v862, %v861
        %v876 = vpack.c.b16 %v864, %v863
        %v877 = vpack.c.b16 %v866, %v865
        %v878 = vpack.c.b16 %v868, %v867
        %v879 = vpack.c.b16 %v870, %v869
        %v880 = vpack.c.b16 %v872, %v871
        %889 = vmatprep.subr.bf16.mxu0 0
        %890 = vmatpush1.bf16.msra.mxu0 %v873
        %891 = vmatprep.subr.bf16.mxu0 0
        %892 = vmatpush1.bf16.msra.mxu0 %v874
        %893 = vmatprep.subr.bf16.mxu0 0
        %894 = vmatpush1.bf16.msra.mxu0 %v875
        %895 = vmatprep.subr.bf16.mxu0 0
        %896 = vmatpush1.bf16.msra.mxu0 %v876
        %897 = vmatprep.subr.bf16.mxu0 0
        %898 = vmatpush1.bf16.msra.mxu0 %v877
        %899 = vmatprep.subr.bf16.mxu0 0
        %900 = vmatpush1.bf16.msra.mxu0 %v878
        %901 = vmatprep.subr.bf16.mxu0 0
        %902 = vmatpush1.bf16.msra.mxu0 %v879
        %903 = vmatprep.subr.bf16.mxu0 0
        %904 = vmatpush1.bf16.msra.mxu0 %v880
        %905 = vmatprep.subr.bf16.mxu0 0
        %906 = vmatpush1.bf16.msra.mxu0 0
        %907 = vmatprep.subr.bf16.mxu0 0
        %908 = vmatpush1.bf16.msra.mxu0 0
        %909 = vmatprep.subr.bf16.mxu0 0
        %910 = vmatpush1.bf16.msra.mxu0 0
        %911 = vmatprep.subr.bf16.mxu0 0
        %912 = vmatpush1.bf16.msra.mxu0 0
        %913 = vmatprep.subr.bf16.mxu0 0
        %914 = vmatpush1.bf16.msra.mxu0 0
        %915 = vmatprep.subr.bf16.mxu0 0
        %916 = vmatpush1.bf16.msra.mxu0 0
        %917 = vmatprep.subr.bf16.mxu0 0
        %918 = vmatpush1.bf16.msra.mxu0 0
        %919 = vmatprep.subr.bf16.mxu0 0
        %920 = vmatpush1.bf16.msra.mxu0 0
        %921 = vmatprep.mubr.bf16.mxu0 0
        %922 = vmatmul.mubr.bf16.gmra.mrb[0].mxu0 %v834
        %v923 = vpop.f32.mrb[0].mxu0
        %v924 = vadd.f32 %v839, %v923
        %v925 = vpop.f32.mrb[0].mxu0
        %v926 = vpop.f32.mrb[0].mxu0
        %v927 = vadd.f32 %v839, %v926
        %v928 = vpop.f32.mrb[0].mxu0
        %929 = vdwg.mxu0
        %v930 = vmax.f32 %v924, 0.0
        %v931 = vmax.f32 %v927, 0.0
        %s932 = scalar_lea.vmem [#allocation7], 256
        %v933 = vld [vmem:[%s932] sm:$0xf]
        %v934 = vld [vmem:[%s932 + $0x4] sm:$0xf]
        %v935 = vld [vmem:[%s932 + $0x8] sm:$0xf]
        %v936 = vld [vmem:[%s932 + $0xc] sm:$0xf]
        %v937 = vld [vmem:[%s932 + $0x10] sm:$0xf]
        %v938 = vld [vmem:[%s932 + $0x14] sm:$0xf]
        %v939 = vld [vmem:[%s932 + $0x18] sm:$0xf]
        %v940 = vld [vmem:[%s932 + $0x1c] sm:$0xf]
        %v941 = vld [vmem:[%s932 + $0x20] sm:$0xf]
        %v942 = vld [vmem:[%s932 + $0x24] sm:$0xf]
        %v943 = vld [vmem:[%s932 + $0x28] sm:$0xf]
        %v944 = vld [vmem:[%s932 + $0x2c] sm:$0xf]
        %v945 = vld [vmem:[%s932 + $0x30] sm:$0xf]
        %v946 = vld [vmem:[%s932 + $0x34] sm:$0xf]
        %v947 = vld [vmem:[%s932 + $0x38] sm:$0xf]
        %v948 = vld [vmem:[%s932 + $0x3c] sm:$0xf]
        %s949 = scalar_lea.vmem %s4, 4
        %v950 = vld [vmem:[%s949] sm:$0x1]
        %v951 = vpack.c.bf16 %v931, %v930
        %v953 = vlaneseq
        %v954 = vshrl.u32 %v953, 7
        %v955 = vsub.s32 0, %v954
        %v956 = vrot.slane %v950, %v955
        %v974 = vunpack.c.l.b16 %v933
        %v975 = vunpack.c.l.b16 %v934
        %v976 = vunpack.c.l.b16 %v935
        %v977 = vunpack.c.l.b16 %v936
        %v978 = vunpack.c.l.b16 %v937
        %v979 = vunpack.c.l.b16 %v938
        %v980 = vunpack.c.l.b16 %v939
        %v981 = vunpack.c.l.b16 %v940
        %v982 = vunpack.c.l.b16 %v941
        %v983 = vunpack.c.l.b16 %v942
        %v984 = vunpack.c.l.b16 %v943
        %v985 = vunpack.c.l.b16 %v944
        %v986 = vunpack.c.l.b16 %v945
        %v987 = vunpack.c.l.b16 %v946
        %v988 = vunpack.c.l.b16 %v947
        %v989 = vunpack.c.l.b16 %v948
        %v990 = vpack.c.b16 %v975, %v974
        %v991 = vpack.c.b16 %v977, %v976
        %v992 = vpack.c.b16 %v979, %v978
        %v993 = vpack.c.b16 %v981, %v980
        %v994 = vpack.c.b16 %v983, %v982
        %v995 = vpack.c.b16 %v985, %v984
        %v996 = vpack.c.b16 %v987, %v986
        %v997 = vpack.c.b16 %v989, %v988
        %1006 = vmatprep.subr.bf16.mxu0 0
        %1007 = vmatpush1.bf16.msra.mxu0 %v990
        %1008 = vmatprep.subr.bf16.mxu0 0
        %1009 = vmatpush1.bf16.msra.mxu0 %v991
        %1010 = vmatprep.subr.bf16.mxu0 0
        %1011 = vmatpush1.bf16.msra.mxu0 %v992
        %1012 = vmatprep.subr.bf16.mxu0 0
        %1013 = vmatpush1.bf16.msra.mxu0 %v993
        %1014 = vmatprep.subr.bf16.mxu0 0
        %1015 = vmatpush1.bf16.msra.mxu0 %v994
        %1016 = vmatprep.subr.bf16.mxu0 0
        %1017 = vmatpush1.bf16.msra.mxu0 %v995
        %1018 = vmatprep.subr.bf16.mxu0 0
        %1019 = vmatpush1.bf16.msra.mxu0 %v996
        %1020 = vmatprep.subr.bf16.mxu0 0
        %1021 = vmatpush1.bf16.msra.mxu0 %v997
        %1022 = vmatprep.subr.bf16.mxu0 0
        %1023 = vmatpush1.bf16.msra.mxu0 0
        %1024 = vmatprep.subr.bf16.mxu0 0
        %1025 = vmatpush1.bf16.msra.mxu0 0
        %1026 = vmatprep.subr.bf16.mxu0 0
        %1027 = vmatpush1.bf16.msra.mxu0 0
        %1028 = vmatprep.subr.bf16.mxu0 0
        %1029 = vmatpush1.bf16.msra.mxu0 0
        %1030 = vmatprep.subr.bf16.mxu0 0
        %1031 = vmatpush1.bf16.msra.mxu0 0
        %1032 = vmatprep.subr.bf16.mxu0 0
        %1033 = vmatpush1.bf16.msra.mxu0 0
        %1034 = vmatprep.subr.bf16.mxu0 0
        %1035 = vmatpush1.bf16.msra.mxu0 0
        %1036 = vmatprep.subr.bf16.mxu0 0
        %1037 = vmatpush1.bf16.msra.mxu0 0
        %1038 = vmatprep.mubr.bf16.mxu0 0
        %1039 = vmatmul.mubr.bf16.gmra.mrb[0].mxu0 %v951
        %v1040 = vpop.f32.mrb[0].mxu0
        %v1041 = vadd.f32 %v956, %v1040
        %v1042 = vpop.f32.mrb[0].mxu0
        %v1043 = vpop.f32.mrb[0].mxu0
        %v1044 = vadd.f32 %v956, %v1043
        %v1045 = vpop.f32.mrb[0].mxu0
        %1046 = vdwg.mxu0
        %v1047 = vmax.f32 %v1041, 0.0
        %v1048 = vmax.f32 %v1044, 0.0
        %s1049 = scalar_lea.vmem [#allocation7], 320
        %v1050 = vld [vmem:[%s1049] sm:$0xf]
        %v1051 = vld [vmem:[%s1049 + $0x4] sm:$0xf]
        %v1052 = vld [vmem:[%s1049 + $0x8] sm:$0xf]
        %v1053 = vld [vmem:[%s1049 + $0xc] sm:$0xf]
        %v1054 = vld [vmem:[%s1049 + $0x10] sm:$0xf]
        %v1055 = vld [vmem:[%s1049 + $0x14] sm:$0xf]
        %v1056 = vld [vmem:[%s1049 + $0x18] sm:$0xf]
        %v1057 = vld [vmem:[%s1049 + $0x1c] sm:$0xf]
        %v1058 = vld [vmem:[%s1049 + $0x20] sm:$0xf]
        %v1059 = vld [vmem:[%s1049 + $0x24] sm:$0xf]
        %v1060 = vld [vmem:[%s1049 + $0x28] sm:$0xf]
        %v1061 = vld [vmem:[%s1049 + $0x2c] sm:$0xf]
        %v1062 = vld [vmem:[%s1049 + $0x30] sm:$0xf]
        %v1063 = vld [vmem:[%s1049 + $0x34] sm:$0xf]
        %v1064 = vld [vmem:[%s1049 + $0x38] sm:$0xf]
        %v1065 = vld [vmem:[%s1049 + $0x3c] sm:$0xf]
        %s1066 = scalar_lea.vmem %s4, 5
        %v1067 = vld [vmem:[%s1066] sm:$0x1]
        %v1068 = vpack.c.bf16 %v1048, %v1047
        %v1070 = vlaneseq
        %v1071 = vshrl.u32 %v1070, 7
        %v1072 = vsub.s32 0, %v1071
        %v1073 = vrot.slane %v1067, %v1072
        %v1091 = vunpack.c.l.b16 %v1050
        %v1092 = vunpack.c.l.b16 %v1051
        %v1093 = vunpack.c.l.b16 %v1052
        %v1094 = vunpack.c.l.b16 %v1053
        %v1095 = vunpack.c.l.b16 %v1054
        %v1096 = vunpack.c.l.b16 %v1055
        %v1097 = vunpack.c.l.b16 %v1056
        %v1098 = vunpack.c.l.b16 %v1057
        %v1099 = vunpack.c.l.b16 %v1058
        %v1100 = vunpack.c.l.b16 %v1059
        %v1101 = vunpack.c.l.b16 %v1060
        %v1102 = vunpack.c.l.b16 %v1061
        %v1103 = vunpack.c.l.b16 %v1062
        %v1104 = vunpack.c.l.b16 %v1063
        %v1105 = vunpack.c.l.b16 %v1064
        %v1106 = vunpack.c.l.b16 %v1065
        %v1107 = vpack.c.b16 %v1092, %v1091
        %v1108 = vpack.c.b16 %v1094, %v1093
        %v1109 = vpack.c.b16 %v1096, %v1095
        %v1110 = vpack.c.b16 %v1098, %v1097
        %v1111 = vpack.c.b16 %v1100, %v1099
        %v1112 = vpack.c.b16 %v1102, %v1101
        %v1113 = vpack.c.b16 %v1104, %v1103
        %v1114 = vpack.c.b16 %v1106, %v1105
        %1123 = vmatprep.subr.bf16.mxu0 0
        %1124 = vmatpush1.bf16.msra.mxu0 %v1107
        %1125 = vmatprep.subr.bf16.mxu0 0
        %1126 = vmatpush1.bf16.msra.mxu0 %v1108
        %1127 = vmatprep.subr.bf16.mxu0 0
        %1128 = vmatpush1.bf16.msra.mxu0 %v1109
        %1129 = vmatprep.subr.bf16.mxu0 0
        %1130 = vmatpush1.bf16.msra.mxu0 %v1110
        %1131 = vmatprep.subr.bf16.mxu0 0
        %1132 = vmatpush1.bf16.msra.mxu0 %v1111
        %1133 = vmatprep.subr.bf16.mxu0 0
        %1134 = vmatpush1.bf16.msra.mxu0 %v1112
        %1135 = vmatprep.subr.bf16.mxu0 0
        %1136 = vmatpush1.bf16.msra.mxu0 %v1113
        %1137 = vmatprep.subr.bf16.mxu0 0
        %1138 = vmatpush1.bf16.msra.mxu0 %v1114
        %1139 = vmatprep.subr.bf16.mxu0 0
        %1140 = vmatpush1.bf16.msra.mxu0 0
        %1141 = vmatprep.subr.bf16.mxu0 0
        %1142 = vmatpush1.bf16.msra.mxu0 0
        %1143 = vmatprep.subr.bf16.mxu0 0
        %1144 = vmatpush1.bf16.msra.mxu0 0
        %1145 = vmatprep.subr.bf16.mxu0 0
        %1146 = vmatpush1.bf16.msra.mxu0 0
        %1147 = vmatprep.subr.bf16.mxu0 0
        %1148 = vmatpush1.bf16.msra.mxu0 0
        %1149 = vmatprep.subr.bf16.mxu0 0
        %1150 = vmatpush1.bf16.msra.mxu0 0
        %1151 = vmatprep.subr.bf16.mxu0 0
        %1152 = vmatpush1.bf16.msra.mxu0 0
        %1153 = vmatprep.subr.bf16.mxu0 0
        %1154 = vmatpush1.bf16.msra.mxu0 0
        %1155 = vmatprep.mubr.bf16.mxu0 0
        %1156 = vmatmul.mubr.bf16.gmra.mrb[0].mxu0 %v1068
        %v1157 = vpop.f32.mrb[0].mxu0
        %v1158 = vadd.f32 %v1073, %v1157
        %v1159 = vpop.f32.mrb[0].mxu0
        %v1160 = vpop.f32.mrb[0].mxu0
        %v1161 = vadd.f32 %v1073, %v1160
        %v1162 = vpop.f32.mrb[0].mxu0
        %1163 = vdwg.mxu0
        %v1164 = vmax.f32 %v1158, 0.0
        %v1165 = vmax.f32 %v1161, 0.0
        %v1166 = vpack.c.bf16 %v1165, %v1164
        %v1167 = vld [vmem:[#allocation8] sm:$0xf]
        %v1168 = vld [vmem:[#allocation8 + $0x4] sm:$0xf]
        %v1169 = vld [vmem:[#allocation8 + $0x8] sm:$0xf]
        %v1170 = vld [vmem:[#allocation8 + $0xc] sm:$0xf]
        %v1171 = vld [vmem:[#allocation8 + $0x10] sm:$0xf]
        %v1172 = vld [vmem:[#allocation8 + $0x14] sm:$0xf]
        %v1173 = vld [vmem:[#allocation8 + $0x18] sm:$0xf]
        %v1174 = vld [vmem:[#allocation8 + $0x1c] sm:$0xf]
        %v1175 = vld [vmem:[#allocation8 + $0x20] sm:$0xf]
        %v1176 = vld [vmem:[#allocation8 + $0x24] sm:$0xf]
        %v1177 = vld [vmem:[#allocation8 + $0x28] sm:$0xf]
        %v1178 = vld [vmem:[#allocation8 + $0x2c] sm:$0xf]
        %v1179 = vld [vmem:[#allocation8 + $0x30] sm:$0xf]
        %v1180 = vld [vmem:[#allocation8 + $0x34] sm:$0xf]
        %v1181 = vld [vmem:[#allocation8 + $0x38] sm:$0xf]
        %v1182 = vld [vmem:[#allocation8 + $0x3c] sm:$0xf]
        %v1183 = vld [vmem:[%s6] sm:$0x1]
        %v1185 = vlaneseq
        %v1186 = vshrl.u32 %v1185, 7
        %v1187 = vsub.s32 0, %v1186
        %v1188 = vrot.slane %v1183, %v1187
        %v1206 = vunpack.c.l.b16 %v1167
        %v1207 = vunpack.c.l.b16 %v1168
        %v1208 = vunpack.c.l.b16 %v1169
        %v1209 = vunpack.c.l.b16 %v1170
        %v1210 = vunpack.c.l.b16 %v1171
        %v1211 = vunpack.c.l.b16 %v1172
        %v1212 = vunpack.c.l.b16 %v1173
        %v1213 = vunpack.c.l.b16 %v1174
        %v1214 = vunpack.c.l.b16 %v1175
        %v1215 = vunpack.c.l.b16 %v1176
        %v1216 = vunpack.c.l.b16 %v1177
        %v1217 = vunpack.c.l.b16 %v1178
        %v1218 = vunpack.c.l.b16 %v1179
        %v1219 = vunpack.c.l.b16 %v1180
        %v1220 = vunpack.c.l.b16 %v1181
        %v1221 = vunpack.c.l.b16 %v1182
        %v1222 = vpack.c.b16 %v1207, %v1206
        %v1223 = vpack.c.b16 %v1209, %v1208
        %v1224 = vpack.c.b16 %v1211, %v1210
        %v1225 = vpack.c.b16 %v1213, %v1212
        %v1226 = vpack.c.b16 %v1215, %v1214
        %v1227 = vpack.c.b16 %v1217, %v1216
        %v1228 = vpack.c.b16 %v1219, %v1218
        %v1229 = vpack.c.b16 %v1221, %v1220
        %1238 = vmatprep.subr.bf16.mxu0 0
        %1239 = vmatpush1.bf16.msra.mxu0 %v1222
        %1240 = vmatprep.subr.bf16.mxu0 0
        %1241 = vmatpush1.bf16.msra.mxu0 %v1223
        %1242 = vmatprep.subr.bf16.mxu0 0
        %1243 = vmatpush1.bf16.msra.mxu0 %v1224
        %1244 = vmatprep.subr.bf16.mxu0 0
        %1245 = vmatpush1.bf16.msra.mxu0 %v1225
        %1246 = vmatprep.subr.bf16.mxu0 0
        %1247 = vmatpush1.bf16.msra.mxu0 %v1226
        %1248 = vmatprep.subr.bf16.mxu0 0
        %1249 = vmatpush1.bf16.msra.mxu0 %v1227
        %1250 = vmatprep.subr.bf16.mxu0 0
        %1251 = vmatpush1.bf16.msra.mxu0 %v1228
        %1252 = vmatprep.subr.bf16.mxu0 0
        %1253 = vmatpush1.bf16.msra.mxu0 %v1229
        %1254 = vmatprep.subr.bf16.mxu0 0
        %1255 = vmatpush1.bf16.msra.mxu0 0
        %1256 = vmatprep.subr.bf16.mxu0 0
        %1257 = vmatpush1.bf16.msra.mxu0 0
        %1258 = vmatprep.subr.bf16.mxu0 0
        %1259 = vmatpush1.bf16.msra.mxu0 0
        %1260 = vmatprep.subr.bf16.mxu0 0
        %1261 = vmatpush1.bf16.msra.mxu0 0
        %1262 = vmatprep.subr.bf16.mxu0 0
        %1263 = vmatpush1.bf16.msra.mxu0 0
        %1264 = vmatprep.subr.bf16.mxu0 0
        %1265 = vmatpush1.bf16.msra.mxu0 0
        %1266 = vmatprep.subr.bf16.mxu0 0
        %1267 = vmatpush1.bf16.msra.mxu0 0
        %1268 = vmatprep.subr.bf16.mxu0 0
        %1269 = vmatpush1.bf16.msra.mxu0 0
        %1270 = vmatprep.mubr.bf16.mxu0 0
        %1271 = vmatmul.mubr.bf16.gmra.mrb[0].mxu0 %v1166
        %v1272 = vpop.f32.mrb[0].mxu0
        %v1273 = vadd.f32 %v1188, %v1272
        %v1274 = vpop.f32.mrb[0].mxu0
        %v1275 = vpop.f32.mrb[0].mxu0
        %v1276 = vadd.f32 %v1188, %v1275
        %v1277 = vpop.f32.mrb[0].mxu0
        %1278 = vdwg.mxu0
        %1279 = vst [vmem:[%s340] sm:$0xff] %v1273
        %1280 = vst [vmem:[%s340 + $0x8] sm:$0xff] %v1276
        %s1281 = sand.u32 %s186, 1
        %s1282 = scalar_lea.sflag [#allocation4], %s1281
        %s1283 = sand.u32 %s186, 1
        %s1284 = smul.addr %s1283, 16
        %s1285 = scalar_lea.vmem [#allocation10], %s1284
        // Predicated region
        $region65: #{tpu_custom_call.1} parent=47 // pred_check
          %p1286 = pneg %p196
        $region66: #{tpu_custom_call.1} parent=47 // pred_check_branch
          %1288 = sbr.rel (%p1286) target = $region68
        $region67: #{tpu_custom_call.1} parent=47 // pred_region
          %s1289 = smul.u32 2, %s26
          %s1291 = ssub.s32 256, 256
          %1292 = vsyncadd %s1282, %s1291
          %s1293 = smul.addr %s1289, 128
          %s1294 = scalar_lea.hbm %s7, %s1293
          %s1295 = sshll.u32 %s1285, 4
          %s1296 = int_to_ptr.vmem [resolvable:$true] %s1295
          %1301 = dma.vmem_to_hbm [thread:$0]  %s1296, 256, %s1294, %s1282, 128, 128, 8
        $region68: #{tpu_custom_call.1} parent=47 // pred_fallthru
          _
      $region48: #{tpu_custom_call.1} parent=5 // pred_fallthru
        _
      %p1302 = scmp.le.s32.totalorder 2, %s21
      // Predicated region
      $region69: #{tpu_custom_call.1} parent=5 // pred_check
        %p1303 = pneg %p1302
      $region70: #{tpu_custom_call.1} parent=5 // pred_check_branch
        %1305 = sbr.rel (%p1303) target = $region72
      $region71: #{tpu_custom_call.1} parent=5 // pred_region
        %s1306 = ssub.s32 %s21, 2
        // Predicated region
        $region73: #{tpu_custom_call.1} parent=71 // pred_check
          %p1307 = pneg %p202
        $region74: #{tpu_custom_call.1} parent=71 // pred_check_branch
          %1309 = sbr.rel (%p1307) target = $region76
        $region75: #{tpu_custom_call.1} parent=71 // pred_region
          %s1310 = sand.u32 %s187, 1
          %s1311 = scalar_lea.sflag [#allocation4], %s1310
          %s1312 = sand.u32 %s187, 1
          %s1313 = smul.addr %s1312, 16
          %s1314 = scalar_lea.vmem [#allocation10], %s1313
          %1315 = dma.done %s1311, 256
        $region76: #{tpu_custom_call.1} parent=71 // pred_fallthru
          _
      $region72: #{tpu_custom_call.1} parent=5 // pred_fallthru
        _
    $region6: #{tpu_custom_call.1} parent=1 // loop_footer
      %s25 = sadd.s32 1, %s21
    $region7: #{tpu_custom_call.1} parent=1 // loop_footer_branch
      %20 = sbr.rel target = $region3
    $region8: #{tpu_custom_call.1} parent=1 // loop_exit
      _
    %1316 = vsyncpa [#allocation3], 1
    %s1317 = scalar_lea.sflag [#allocation3], 1
    %1318 = vsyncpa %s1317, 1
    %1319 = vsyncpa [#allocation6], 1
    %1320 = vsyncpa [#allocation9], 1
    %1321 = vsyncpa [#allocation4], 1
    %s1322 = scalar_lea.sflag [#allocation4], 1
    %1323 = vsyncpa %s1322, 1

</llo_original>
